<compile_context>
chip_gen: v7x
topology: tpu7x:2x2x1
jax: 0.10.0
libtpu: 0.0.40
codegen_flags: <defaults>
</compile_context>

<pallas_src>
import jax
import jax.numpy as jnp
from jax.experimental import pallas as pl
from jax.experimental.pallas import tpu as pltpu

D_PAD = 128                    # lane-padded width for features / hidden / classes
OFF_E = 64                     # lane offset of the edge-aggregation block
COMPUTE_DTYPE = jnp.bfloat16   # MXU-native operand dtype (accumulation stays f32)


# ---------------- fused Pallas kernel (whole forward pass, E-tiled) ----------------

def edgnn_fused_kernel(x_ref, dst_ref, src_ref, ef_ref, mem_ref,
                       w_ref, wfc_ref, bfc_ref, out_ref,
                       h_ref, eagg_ref, eaggb_ref, m_ref, cat_ref):
    f32 = jnp.float32
    cdt = x_ref.dtype                         # compute dtype (bf16)

    l = pl.program_id(0)                      # edGNN layer index (sequential)
    e = pl.program_id(1)                      # E-tile index (reduction axis, innermost)
    last_l = pl.num_programs(0) - 1
    last_e = pl.num_programs(1) - 1

    # -------- init (once / once per layer) --------
    @pl.when((l == 0) & (e == 0))
    def _():
        h_ref[...] = x_ref[...]               # h0 = node_features (bf16, lane-padded)
        eagg_ref[...] = jnp.zeros_like(eagg_ref)

    @pl.when(e == 0)
    def _():
        m_ref[...] = jnp.zeros_like(m_ref)

    # -------- streamed E tile: neighbour + edge aggregation --------
    hb = h_ref[...]                                                     # (N, 128) bf16
    # adj @ h without a dense NxN adjacency:  dst_onehot @ (src_onehot @ h)
    t = jnp.dot(src_ref[...], hb, preferred_element_type=f32)           # (TE, 128)
    # dst entries are exactly 0/1, so casting t to bf16 rounds it only once; keeping
    # t in f32 would turn the dominant matmul into a multi-pass f32 MXU op.
    m_ref[...] += jnp.dot(dst_ref[...], t.astype(cdt),
                          preferred_element_type=f32)                   # (N, 128)

    @pl.when(l == 0)
    def _():
        # layer-invariant: eagg[v] = sum_{e: dst(e)=v} edge_features[e]
        # (edge features sit at lanes [OFF_E, OFF_E+edge_dim) -> disjoint from m's band)
        eagg_ref[...] += jnp.dot(dst_ref[...], ef_ref[...],
                                 preferred_element_type=f32)

    # -------- per-layer finalize (after the last E tile) --------
    @pl.when(e == last_e)
    def _():
        @pl.when(l == 0)
        def _():
            eaggb_ref[...] = eagg_ref[...].astype(cdt)   # freeze eagg to bf16, once

        # disjoint lane bands -> bf16 add is exact (replaces a full-width f32 add)
        ne = m_ref[...].astype(cdt) + eaggb_ref[...]
        # single K=256 dot against [w_self ; w_nbr|w_edge]: fills the 256-deep MXU on
        # v6e/v7x; lane-concat is built with two aligned lane-dense stores to scratch.
        cat_ref[:, :D_PAD] = hb
        cat_ref[:, D_PAD:] = ne
        z = jnp.dot(cat_ref[...], w_ref[...], preferred_element_type=f32)   # (N, 128)
        h_new = jnp.maximum(z, 0.0).astype(cdt)          # F.relu; layer Linear has no bias
        h_ref[...] = h_new

        @pl.when(l == last_l)
        def _():
            # readout: dgl.sum_nodes per graph, then classification fc (with bias)
            s = jnp.dot(mem_ref[...], h_new, preferred_element_type=f32)    # (B, 128)
            out_ref[...] = (jnp.dot(s.astype(cdt), wfc_ref[...],
                                    preferred_element_type=f32) + bfc_ref[...])


# ---------------- host-side helpers (padding, tiling, weight stacking) ----------------

def _round_up(x, m):
    return (x + m - 1) // m * m


def _pad2d(a, rows, cols, row_off=0, col_off=0):
    r, c = a.shape
    return jnp.zeros((rows, cols), a.dtype).at[row_off:row_off + r,
                                               col_off:col_off + c].set(a)


def _stream_spec(block_shape, index_map, nbuf=2):
    """BlockSpec with explicit multi-buffering when the installed jax supports it."""
    try:
        return pl.BlockSpec(block_shape, index_map, pipeline_mode=pl.Buffered(nbuf))
    except Exception:      # older API: fall back to the default double-buffering
        return pl.BlockSpec(block_shape, index_map)


def _vmem_capacity_bytes():
    """Per-core VMEM (128 MiB v5e/v6e, 64 MiB v7x); conservative fallback."""
    try:
        return int(pltpu.get_tpu_info().vmem_capacity_bytes)
    except Exception:
        return 64 * 1024 * 1024


def _select_tiles(n_pad, b_pad, e_raw, n_layers):
    """Per-generation VMEM budget -> scoped-VMEM limit and E-tile size TE."""
    cap = _vmem_capacity_bytes()
    vmem_limit = (3 * cap) // 4                       # headroom below physical VMEM
    resident = (n_pad * D_PAD * 2                     # node features (bf16)
                + b_pad * n_pad * 2                   # membership matrix (bf16)
                + n_layers * 2 * D_PAD * D_PAD * 2    # stacked layer weights (bf16)
                + D_PAD * D_PAD * 2 + D_PAD * 4       # fc weight / bias
                + b_pad * D_PAD * 4                   # output
                + n_pad * D_PAD * (2 + 4 + 2 + 4)     # h, eagg, eagg_bf16, m scratches
                + n_pad * 2 * D_PAD * 2)              # K=256 fused operand scratch
    # streamed bytes per E column per buffer: dst row-block + src col-block + edge feats
    per_col = (2 * n_pad + D_PAD) * 2
    budget = max(vmem_limit // 2 - resident, 2 * 128 * per_col)
    te = max(128, (budget // (2 * per_col)) // 128 * 128)
    te = min(te, _round_up(e_raw, 128))
    e_pad = _round_up(e_raw, te)
    return te, e_pad, vmem_limit


def pack_edgnn_inputs(node_features, edge_features, dst_onehot, src_onehot,
                      member, layer_params, wfc, bfc, n_pad, e_pad, b_pad,
                      compute_dtype=COMPUTE_DTYPE):
    """Zero-pad to lane-dense (…,128) layouts; stack per-layer weights as (L, 256, 128)."""
    edge_dim = edge_features.shape[1]
    d_ins = [ws.shape[0] for (ws, _, _) in layer_params]
    u_outs = [ws.shape[1] for (ws, _, _) in layer_params]
    assert max(d_ins) <= OFF_E, "input/hidden width must fit below the edge lane block"
    assert OFF_E + edge_dim <= D_PAD and max(u_outs) <= D_PAD

    w_list = []
    for (w_self, w_nbr, w_edge) in layer_params:
        d_in, u = w_self.shape
        # rows [0,128): self block; rows [128,256): neighbour block at [128,128+d_in)
        # plus edge block at [128+OFF_E, 128+OFF_E+edge_dim) -> one K=256 dot per layer.
        w = (jnp.zeros((2 * D_PAD, D_PAD), jnp.float32)
             .at[:d_in, :u].set(w_self)
             .at[D_PAD:D_PAD + d_in, :u].set(w_nbr)
             .at[D_PAD + OFF_E:D_PAD + OFF_E + edge_dim, :u].set(w_edge))
        w_list.append(w)

    x_p = _pad2d(node_features, n_pad, D_PAD).astype(compute_dtype)
    ef_p = _pad2d(edge_features, e_pad, D_PAD, col_off=OFF_E).astype(compute_dtype)
    dst_p = _pad2d(dst_onehot, n_pad, e_pad).astype(compute_dtype)
    src_p = _pad2d(src_onehot, e_pad, n_pad).astype(compute_dtype)
    mem_p = _pad2d(member, b_pad, n_pad).astype(compute_dtype)
    w256_p = jnp.stack(w_list).astype(compute_dtype)              # (L, 256, 128)
    wfc_p = _pad2d(wfc, D_PAD, D_PAD).astype(compute_dtype)
    bfc_p = _pad2d(bfc, 1, D_PAD)                                 # f32, post-accum add
    return x_p, dst_p, src_p, ef_p, mem_p, w256_p, wfc_p, bfc_p


# ---------------- end-to-end forward (single pallas_call) ----------------

def edgnn_forward(node_features, edge_features, dst_onehot, src_onehot, member,
                  layer_params, wfc, bfc):
    n_classes = wfc.shape[1]
    b, n = member.shape
    e_raw = edge_features.shape[0]
    n_layers = len(layer_params)
    n_pad = _round_up(n, 128)                 # N is a lane axis of src_onehot / member
    b_pad = _round_up(b, 8)                   # sublane padding for the output rows
    te, e_pad, vmem_limit = _select_tiles(n_pad, b_pad, e_raw, n_layers)
    n_e_tiles = e_pad // te

    args = pack_edgnn_inputs(node_features, edge_features, dst_onehot, src_onehot,
                             member, layer_params, wfc, bfc, n_pad, e_pad, b_pad)
    x_p, dst_p, src_p, ef_p, mem_p, w256_p, wfc_p, bfc_p = args

    const2 = lambda l, e: (0, 0)
    in_specs = [
        pl.BlockSpec((n_pad, D_PAD), const2),                        # node features (resident)
        _stream_spec((n_pad, te), lambda l, e: (0, e)),              # dst one-hot   (N, TE)
        _stream_spec((te, n_pad), lambda l, e: (e, 0)),              # src one-hot   (TE, N)
        # edge features are only consumed at layer 0; pin to block 0 afterwards so
        # they are not re-streamed every layer.
        _stream_spec((te, D_PAD), lambda l, e: (jnp.where(l == 0, e, 0), 0)),
        pl.BlockSpec((b_pad, n_pad), const2),                        # graph membership
        pl.BlockSpec((None, 2 * D_PAD, D_PAD), lambda l, e: (l, 0, 0)),  # stacked weights
        pl.BlockSpec((D_PAD, D_PAD), const2),                        # fc weight
        pl.BlockSpec((1, D_PAD), const2),                            # fc bias
    ]
    out_spec = pl.BlockSpec((b_pad, D_PAD), const2)

    scratch_shapes = [
        pltpu.VMEM((n_pad, D_PAD), COMPUTE_DTYPE),     # h (current node states)
        pltpu.VMEM((n_pad, D_PAD), jnp.float32),       # eagg f32 accumulator (layer 0)
        pltpu.VMEM((n_pad, D_PAD), COMPUTE_DTYPE),     # eagg frozen to bf16
        pltpu.VMEM((n_pad, D_PAD), jnp.float32),       # neighbour-agg accumulator
        pltpu.VMEM((n_pad, 2 * D_PAD), COMPUTE_DTYPE), # K=256 fused matmul operand
    ]

    mm = lambda m, k, n_: 2 * m * k * n_
    flops = (n_layers * (mm(e_pad, n_pad, D_PAD) + mm(n_pad, e_pad, D_PAD)
                         + mm(n_pad, 2 * D_PAD, D_PAD))
             + mm(n_pad, e_pad, D_PAD)                       # edge aggregation (layer 0)
             + mm(b_pad, n_pad, D_PAD) + mm(b_pad, D_PAD, D_PAD))
    bytes_accessed = (n_layers * (int(dst_p.size) + int(src_p.size)) * 2
                      + int(ef_p.size) * 2 + int(x_p.size) * 2 + int(mem_p.size) * 2
                      + int(w256_p.size) * 2 + int(wfc_p.size) * 2 + int(bfc_p.size) * 4
                      + b_pad * D_PAD * 4)

    out_p = pl.pallas_call(
        edgnn_fused_kernel,
        out_shape=jax.ShapeDtypeStruct((b_pad, D_PAD), jnp.float32),
        grid_spec=pltpu.PrefetchScalarGridSpec(
            num_scalar_prefetch=0,
            grid=(n_layers, n_e_tiles),
            in_specs=in_specs,
            out_specs=out_spec,
            scratch_shapes=scratch_shapes),
        compiler_params=pltpu.CompilerParams(
            # layer axis is sequential, E axis is a reduction -> both "arbitrary"
            dimension_semantics=("arbitrary", "arbitrary"),
            vmem_limit_bytes=int(vmem_limit)),
        cost_estimate=pl.CostEstimate(flops=int(flops), transcendentals=0,
                                      bytes_accessed=int(bytes_accessed)),
    )(*args)
    return out_p[:b, :n_classes]


if __name__ == "__main__":
    key = jax.random.PRNGKey(0)
    TYPE_WEIGHT = 5.0            # Model.type_weight

    # small synthetic batched graph (2 graphs)
    N, E, B = 32, 64, 2
    T_n, L_n = 4, 8              # node type / label dims  -> node_dim = 12
    T_e, L_e = 3, 5              # edge type / label dims  -> edge_dim = 8
    n_units = [32, 32]           # config_params['layer_params']['n_units'], relu
    n_classes = 5

    keys = jax.random.split(key, 12)

    # graph structure
    src = jax.random.randint(keys[0], (E,), 0, N)
    dst = jax.random.randint(keys[1], (E,), 0, N)
    node_graph = jnp.concatenate(
        [jnp.zeros(N // 2, jnp.int32), jnp.ones(N - N // 2, jnp.int32)])

    # raw graph data (DGL ndata / edata)
    node_types = jax.random.randint(keys[2], (N, T_n), 0, 3).astype(jnp.float32)
    node_labels = jax.random.normal(keys[3], (N, L_n), jnp.float32)
    edge_types = jax.random.randint(keys[4], (E, T_e), 0, 3).astype(jnp.float32)
    edge_labels = jax.random.normal(keys[5], (E, L_e), jnp.float32)

    # ---- glue: feature construction exactly as in Model.forward ----
    node_features = jnp.concatenate([node_types / TYPE_WEIGHT, node_labels], axis=1)
    edge_features = jnp.concatenate([edge_types / TYPE_WEIGHT, edge_labels], axis=1)
    node_dim = node_features.shape[1]
    edge_dim = edge_features.shape[1]

    # ---- glue: factored graph operators (no dense NxN adjacency) ----
    dst_onehot = (dst[None, :] == jnp.arange(N)[:, None]).astype(jnp.float32)     # (N, E)
    src_onehot = (src[:, None] == jnp.arange(N)[None, :]).astype(jnp.float32)     # (E, N)
    member = (node_graph[None, :] == jnp.arange(B)[:, None]).astype(jnp.float32)  # (B, N)

    # ---- deterministic parameter init (shapes from Model.build_model) ----
    layer_params = []
    d_in = node_dim
    k = 6
    for u in n_units:
        # edGNNLayer: nn.Linear(2*d_in + edge_dim, u, bias=None) -> weight.T split 3 ways
        w = jax.random.normal(keys[k], (2 * d_in + edge_dim, u), jnp.float32) * 0.1
        k += 1
        layer_params.append((w[:d_in], w[d_in:2 * d_in], w[2 * d_in:]))
        d_in = u
    wfc = jax.random.normal(keys[k], (n_units[-1], n_classes), jnp.float32) * 0.1
    bfc = jax.random.normal(keys[k + 1], (1, n_classes), jnp.float32) * 0.1

    # ---- run the fused Pallas kernel ----
    out = edgnn_forward(node_features, edge_features, dst_onehot, src_onehot,
                        member, layer_params, wfc, bfc)
    out = jax.block_until_ready(out)

    # ---- pure-JAX f32 reference ----
    adj = dst_onehot @ src_onehot
    eagg = dst_onehot @ edge_features
    h_r = node_features
    for (w_self, w_nbr, w_edge) in layer_params:
        h_r = jnp.maximum(h_r @ w_self + (adj @ h_r) @ w_nbr + eagg @ w_edge, 0.0)
    ref = member @ h_r @ wfc + bfc

    assert out.shape == (B, n_classes)
    # bf16 operands / f32 accumulation -> compare against the f32 reference loosely.
    assert jnp.allclose(out, ref, atol=5e-2, rtol=5e-2), "mismatch vs reference"

    print("KERNEL_OK")
</pallas_src>

<mosaic_0001>
module attributes {stable_mosaic.version = 11 : i64} {
  func.func @edgnn_fused_kernel(%arg0: i32, %arg1: i32, %arg2: memref<128x128xbf16, #tpu.memory_space<vmem>>, %arg3: memref<128x128xbf16, #tpu.memory_space<vmem>>, %arg4: memref<128x128xbf16, #tpu.memory_space<vmem>>, %arg5: memref<128x128xbf16, #tpu.memory_space<vmem>>, %arg6: memref<8x128xbf16, #tpu.memory_space<vmem>>, %arg7: memref<1x256x128xbf16, #tpu.memory_space<vmem>>, %arg8: memref<128x128xbf16, #tpu.memory_space<vmem>>, %arg9: memref<1x128xf32, #tpu.memory_space<vmem>>, %arg10: memref<8x128xf32, #tpu.memory_space<vmem>>, %arg11: memref<128x128xbf16, #tpu.memory_space<vmem>>, %arg12: memref<128x128xf32, #tpu.memory_space<vmem>>, %arg13: memref<128x128xbf16, #tpu.memory_space<vmem>>, %arg14: memref<128x128xf32, #tpu.memory_space<vmem>>, %arg15: memref<128x256xbf16, #tpu.memory_space<vmem>>) attributes {dimension_semantics = [#tpu.dimension_semantics<arbitrary>, #tpu.dimension_semantics<arbitrary>], iteration_bounds = array<i64: 2, 1>, scalar_prefetch = 0 : i64, scratch_operands = 5 : i64, tpu.core_type = #tpu.core_type<tc>, window_params = [{pipeline_mode = #tpu.pipeline_mode<synchronous>, transform_indices = @transform_0, window_bounds = array<i64: 128, 128>}, {pipeline_mode = #tpu.pipeline_mode<double_buffered>, transform_indices = @transform_1, window_bounds = array<i64: 128, 128>}, {pipeline_mode = #tpu.pipeline_mode<double_buffered>, transform_indices = @transform_2, window_bounds = array<i64: 128, 128>}, {pipeline_mode = #tpu.pipeline_mode<double_buffered>, transform_indices = @transform_3, window_bounds = array<i64: 128, 128>}, {pipeline_mode = #tpu.pipeline_mode<synchronous>, transform_indices = @transform_4, window_bounds = array<i64: 8, 128>}, {transform_indices = @transform_5, window_bounds = array<i64: 1, 256, 128>}, {pipeline_mode = #tpu.pipeline_mode<synchronous>, transform_indices = @transform_6, window_bounds = array<i64: 128, 128>}, {pipeline_mode = #tpu.pipeline_mode<synchronous>, transform_indices = @transform_7, window_bounds = array<i64: 1, 128>}, {pipeline_mode = #tpu.pipeline_mode<synchronous>, transform_indices = @transform_8, window_bounds = array<i64: 8, 128>}]} {
    %c0_i32 = arith.constant 0 : i32
    %0 = arith.cmpi eq, %arg0, %c0_i32 : i32
    %c0_i32_0 = arith.constant 0 : i32
    %1 = arith.cmpi eq, %arg1, %c0_i32_0 : i32
    %2 = arith.andi %0, %1 : i1
    %3 = arith.extui %2 : i1 to i32
    %c0_i32_1 = arith.constant 0 : i32
    %4 = arith.cmpi ne, %3, %c0_i32_1 : i32
    scf.if %4 {
      %c0_18 = arith.constant 0 : index
      %c0_19 = arith.constant 0 : index
      %23 = vector.load %arg2[%c0_18, %c0_19] : memref<128x128xbf16, #tpu.memory_space<vmem>>, vector<128x128xbf16>
      %c0_20 = arith.constant 0 : index
      %c0_21 = arith.constant 0 : index
      %24 = vector.load %arg11[%c0_20, %c0_21] : memref<128x128xbf16, #tpu.memory_space<vmem>>, vector<128x128xbf16>
      tpu.vector_store %arg11[%c0_20, %c0_21], %23 {strides = array<i32>} : memref<128x128xbf16, #tpu.memory_space<vmem>>, vector<128x128xbf16>,
      %cst_22 = arith.constant 0.000000e+00 : f32
      %25 = vector.broadcast %cst_22 : f32 to vector<128x128xf32>
      %c0_23 = arith.constant 0 : index
      %c0_24 = arith.constant 0 : index
      %26 = vector.load %arg12[%c0_23, %c0_24] : memref<128x128xf32, #tpu.memory_space<vmem>>, vector<128x128xf32>
      tpu.vector_store %arg12[%c0_23, %c0_24], %25 {strides = array<i32>} : memref<128x128xf32, #tpu.memory_space<vmem>>, vector<128x128xf32>,
    } else {
    }
    %c0_i32_2 = arith.constant 0 : i32
    %5 = arith.cmpi eq, %arg1, %c0_i32_2 : i32
    %6 = arith.extui %5 : i1 to i32
    %c0_i32_3 = arith.constant 0 : i32
    %7 = arith.cmpi ne, %6, %c0_i32_3 : i32
    scf.if %7 {
      %cst_18 = arith.constant 0.000000e+00 : f32
      %23 = vector.broadcast %cst_18 : f32 to vector<128x128xf32>
      %c0_19 = arith.constant 0 : index
      %c0_20 = arith.constant 0 : index
      %24 = vector.load %arg14[%c0_19, %c0_20] : memref<128x128xf32, #tpu.memory_space<vmem>>, vector<128x128xf32>
      tpu.vector_store %arg14[%c0_19, %c0_20], %23 {strides = array<i32>} : memref<128x128xf32, #tpu.memory_space<vmem>>, vector<128x128xf32>,
    } else {
    }
    %c0 = arith.constant 0 : index
    %c0_4 = arith.constant 0 : index
    %8 = vector.load %arg11[%c0, %c0_4] : memref<128x128xbf16, #tpu.memory_space<vmem>>, vector<128x128xbf16>
    %c0_5 = arith.constant 0 : index
    %c0_6 = arith.constant 0 : index
    %9 = vector.load %arg4[%c0_5, %c0_6] : memref<128x128xbf16, #tpu.memory_space<vmem>>, vector<128x128xbf16>
    %cst = arith.constant dense<0.000000e+00> : vector<128x128xf32>
    %10 = tpu.matmul %9, %8, %cst {dimension_numbers = #tpu.dot_dimension_numbers<[1], [0], [0], [1], [0, 0, 1, 1], [], []>} : vector<128x128xbf16>, vector<128x128xbf16>, vector<128x128xf32> -> vector<128x128xf32>
    %c0_7 = arith.constant 0 : index
    %c0_8 = arith.constant 0 : index
    %11 = vector.load %arg14[%c0_7, %c0_8] : memref<128x128xf32, #tpu.memory_space<vmem>>, vector<128x128xf32>
    %c0_9 = arith.constant 0 : index
    %c0_10 = arith.constant 0 : index
    %12 = vector.load %arg3[%c0_9, %c0_10] : memref<128x128xbf16, #tpu.memory_space<vmem>>, vector<128x128xbf16>
    %13 = arith.truncf %10 : vector<128x128xf32> to vector<128x128xbf16>
    %cst_11 = arith.constant dense<0.000000e+00> : vector<128x128xf32>
    %14 = tpu.matmul %12, %13, %cst_11 {dimension_numbers = #tpu.dot_dimension_numbers<[1], [0], [0], [1], [0, 0, 1, 1], [], []>} : vector<128x128xbf16>, vector<128x128xbf16>, vector<128x128xf32> -> vector<128x128xf32>
    %15 = arith.addf %11, %14 : vector<128x128xf32>
    %c0_12 = arith.constant 0 : index
    %c0_13 = arith.constant 0 : index
    %16 = vector.load %arg14[%c0_12, %c0_13] : memref<128x128xf32, #tpu.memory_space<vmem>>, vector<128x128xf32>
    tpu.vector_store %arg14[%c0_12, %c0_13], %15 {strides = array<i32>} : memref<128x128xf32, #tpu.memory_space<vmem>>, vector<128x128xf32>,
    %c0_i32_14 = arith.constant 0 : i32
    %17 = arith.cmpi eq, %arg0, %c0_i32_14 : i32
    %18 = arith.extui %17 : i1 to i32
    %c0_i32_15 = arith.constant 0 : i32
    %19 = arith.cmpi ne, %18, %c0_i32_15 : i32
    scf.if %19 {
      %c0_18 = arith.constant 0 : index
      %c0_19 = arith.constant 0 : index
      %23 = vector.load %arg12[%c0_18, %c0_19] : memref<128x128xf32, #tpu.memory_space<vmem>>, vector<128x128xf32>
      %c0_20 = arith.constant 0 : index
      %c0_21 = arith.constant 0 : index
      %24 = vector.load %arg3[%c0_20, %c0_21] : memref<128x128xbf16, #tpu.memory_space<vmem>>, vector<128x128xbf16>
      %c0_22 = arith.constant 0 : index
      %c0_23 = arith.constant 0 : index
      %25 = vector.load %arg5[%c0_22, %c0_23] : memref<128x128xbf16, #tpu.memory_space<vmem>>, vector<128x128xbf16>
      %cst_24 = arith.constant dense<0.000000e+00> : vector<128x128xf32>
      %26 = tpu.matmul %24, %25, %cst_24 {dimension_numbers = #tpu.dot_dimension_numbers<[1], [0], [0], [1], [0, 0, 1, 1], [], []>} : vector<128x128xbf16>, vector<128x128xbf16>, vector<128x128xf32> -> vector<128x128xf32>
      %27 = arith.addf %23, %26 : vector<128x128xf32>
      %c0_25 = arith.constant 0 : index
      %c0_26 = arith.constant 0 : index
      %28 = vector.load %arg12[%c0_25, %c0_26] : memref<128x128xf32, #tpu.memory_space<vmem>>, vector<128x128xf32>
      tpu.vector_store %arg12[%c0_25, %c0_26], %27 {strides = array<i32>} : memref<128x128xf32, #tpu.memory_space<vmem>>, vector<128x128xf32>,
    } else {
    }
    %c0_i32_16 = arith.constant 0 : i32
    %20 = arith.cmpi eq, %arg1, %c0_i32_16 : i32
    %21 = arith.extui %20 : i1 to i32
    %c0_i32_17 = arith.constant 0 : i32
    %22 = arith.cmpi ne, %21, %c0_i32_17 : i32
    scf.if %22 {
      %c0_i32_18 = arith.constant 0 : i32
      %23 = arith.cmpi eq, %arg0, %c0_i32_18 : i32
      %24 = arith.extui %23 : i1 to i32
      %c0_i32_19 = arith.constant 0 : i32
      %25 = arith.cmpi ne, %24, %c0_i32_19 : i32
      scf.if %25 {
        %c0_37 = arith.constant 0 : index
        %c0_38 = arith.constant 0 : index
        %43 = vector.load %arg12[%c0_37, %c0_38] : memref<128x128xf32, #tpu.memory_space<vmem>>, vector<128x128xf32>
        %44 = arith.truncf %43 : vector<128x128xf32> to vector<128x128xbf16>
        %c0_39 = arith.constant 0 : index
        %c0_40 = arith.constant 0 : index
        %45 = vector.load %arg13[%c0_39, %c0_40] : memref<128x128xbf16, #tpu.memory_space<vmem>>, vector<128x128xbf16>
        tpu.vector_store %arg13[%c0_39, %c0_40], %44 {strides = array<i32>} : memref<128x128xbf16, #tpu.memory_space<vmem>>, vector<128x128xbf16>,
      } else {
      }
      %c0_20 = arith.constant 0 : index
      %c0_21 = arith.constant 0 : index
      %26 = vector.load %arg14[%c0_20, %c0_21] : memref<128x128xf32, #tpu.memory_space<vmem>>, vector<128x128xf32>
      %27 = arith.truncf %26 : vector<128x128xf32> to vector<128x128xbf16>
      %c0_22 = arith.constant 0 : index
      %c0_23 = arith.constant 0 : index
      %28 = vector.load %arg13[%c0_22, %c0_23] : memref<128x128xbf16, #tpu.memory_space<vmem>>, vector<128x128xbf16>
      %29 = arith.addf %27, %28 : vector<128x128xbf16>
      %c0_24 = arith.constant 0 : index
      %c0_25 = arith.constant 0 : index
      %30 = vector.load %arg15[%c0_24, %c0_25] : memref<128x256xbf16, #tpu.memory_space<vmem>>, vector<128x128xbf16>
      tpu.vector_store %arg15[%c0_24, %c0_25], %8 {strides = array<i32>} : memref<128x256xbf16, #tpu.memory_space<vmem>>, vector<128x128xbf16>,
      %c0_26 = arith.constant 0 : index
      %c128 = arith.constant 128 : index
      %31 = vector.load %arg15[%c0_26, %c128] : memref<128x256xbf16, #tpu.memory_space<vmem>>, vector<128x128xbf16>
      tpu.vector_store %arg15[%c0_26, %c128], %29 {strides = array<i32>} : memref<128x256xbf16, #tpu.memory_space<vmem>>, vector<128x128xbf16>,
      %c0_27 = arith.constant 0 : index
      %c0_28 = arith.constant 0 : index
      %32 = vector.load %arg15[%c0_27, %c0_28] : memref<128x256xbf16, #tpu.memory_space<vmem>>, vector<128x256xbf16>
      %c0_29 = arith.constant 0 : index
      %c0_30 = arith.constant 0 : index
      %c0_31 = arith.constant 0 : index
      %33 = vector.load %arg7[%c0_29, %c0_30, %c0_31] : memref<1x256x128xbf16, #tpu.memory_space<vmem>>, vector<1x256x128xbf16>
      %34 = vector.shape_cast %33 : vector<1x256x128xbf16> to vector<256x128xbf16>
      %cst_32 = arith.constant dense<0.000000e+00> : vector<128x128xf32>
      %35 = tpu.matmul %32, %34, %cst_32 {dimension_numbers = #tpu.dot_dimension_numbers<[1], [0], [0], [1], [0, 0, 1, 1], [], []>} : vector<128x256xbf16>, vector<256x128xbf16>, vector<128x128xf32> -> vector<128x128xf32>
      %cst_33 = arith.constant 0.000000e+00 : f32
      %36 = vector.broadcast %cst_33 : f32 to vector<128x128xf32>
      %37 = arith.maximumf %35, %36 : vector<128x128xf32>
      %38 = arith.truncf %37 : vector<128x128xf32> to vector<128x128xbf16>
      %c0_34 = arith.constant 0 : index
      %c0_35 = arith.constant 0 : index
      %39 = vector.load %arg11[%c0_34, %c0_35] : memref<128x128xbf16, #tpu.memory_space<vmem>>, vector<128x128xbf16>
      tpu.vector_store %arg11[%c0_34, %c0_35], %38 {strides = array<i32>} : memref<128x128xbf16, #tpu.memory_space<vmem>>, vector<128x128xbf16>,
      %c1_i32 = arith.constant 1 : i32
      %40 = arith.cmpi eq, %arg0, %c1_i32 : i32
      %41 = arith.extui %40 : i1 to i32
      %c0_i32_36 = arith.constant 0 : i32
      %42 = arith.cmpi ne, %41, %c0_i32_36 : i32
      scf.if %42 {
        %c0_37 = arith.constant 0 : index
        %c0_38 = arith.constant 0 : index
        %43 = vector.load %arg6[%c0_37, %c0_38] : memref<8x128xbf16, #tpu.memory_space<vmem>>, vector<8x128xbf16>
        %cst_39 = arith.constant dense<0.000000e+00> : vector<8x128xf32>
        %44 = tpu.matmul %43, %38, %cst_39 {dimension_numbers = #tpu.dot_dimension_numbers<[1], [0], [0], [1], [0, 0, 1, 1], [], []>} : vector<8x128xbf16>, vector<128x128xbf16>, vector<8x128xf32> -> vector<8x128xf32>
        %45 = arith.truncf %44 : vector<8x128xf32> to vector<8x128xbf16>
        %c0_40 = arith.constant 0 : index
        %c0_41 = arith.constant 0 : index
        %46 = vector.load %arg8[%c0_40, %c0_41] : memref<128x128xbf16, #tpu.memory_space<vmem>>, vector<128x128xbf16>
        %cst_42 = arith.constant dense<0.000000e+00> : vector<8x128xf32>
        %47 = tpu.matmul %45, %46, %cst_42 {dimension_numbers = #tpu.dot_dimension_numbers<[1], [0], [0], [1], [0, 0, 1, 1], [], []>} : vector<8x128xbf16>, vector<128x128xbf16>, vector<8x128xf32> -> vector<8x128xf32>
        %c0_43 = arith.constant 0 : index
        %c0_44 = arith.constant 0 : index
        %48 = vector.load %arg9[%c0_43, %c0_44] : memref<1x128xf32, #tpu.memory_space<vmem>>, vector<1x128xf32>
        %49 = vector.broadcast %48 : vector<1x128xf32> to vector<8x128xf32>
        %50 = arith.addf %47, %49 : vector<8x128xf32>
        %c0_45 = arith.constant 0 : index
        %c0_46 = arith.constant 0 : index
        %51 = vector.load %arg10[%c0_45, %c0_46] : memref<8x128xf32, #tpu.memory_space<vmem>>, vector<8x128xf32>
        tpu.vector_store %arg10[%c0_45, %c0_46], %50 {strides = array<i32>} : memref<8x128xf32, #tpu.memory_space<vmem>>, vector<8x128xf32>,
      } else {
      }
    } else {
    }
    return
  }
  func.func @transform_0(%arg0: i32, %arg1: i32) -> (i32, i32) {
    %c0_i32 = arith.constant 0 : i32
    %c0_i32_0 = arith.constant 0 : i32
    %c0_i32_1 = arith.constant 0 : i32
    return %c0_i32, %c0_i32_0 : i32, i32
  }
  func.func @transform_1(%arg0: i32, %arg1: i32) -> (i32, i32) {
    %c0_i32 = arith.constant 0 : i32
    %c0_i32_0 = arith.constant 0 : i32
    return %c0_i32, %arg1 : i32, i32
  }
  func.func @transform_2(%arg0: i32, %arg1: i32) -> (i32, i32) {
    %c0_i32 = arith.constant 0 : i32
    %c0_i32_0 = arith.constant 0 : i32
    return %arg1, %c0_i32 : i32, i32
  }
  func.func @transform_3(%arg0: i32, %arg1: i32) -> (i32, i32) {
    %c0_i32 = arith.constant 0 : i32
    %0 = arith.cmpi eq, %arg0, %c0_i32 : i32
    %c0_i32_0 = arith.constant 0 : i32
    %1 = arith.select %0, %arg1, %c0_i32_0 : i32
    %c0_i32_1 = arith.constant 0 : i32
    %c0_i32_2 = arith.constant 0 : i32
    return %1, %c0_i32_1 : i32, i32
  }
  func.func @transform_4(%arg0: i32, %arg1: i32) -> (i32, i32) {
    %c0_i32 = arith.constant 0 : i32
    %c0_i32_0 = arith.constant 0 : i32
    %c0_i32_1 = arith.constant 0 : i32
    return %c0_i32, %c0_i32_0 : i32, i32
  }
  func.func @transform_5(%arg0: i32, %arg1: i32) -> (i32, i32, i32) {
    %c0_i32 = arith.constant 0 : i32
    %c0_i32_0 = arith.constant 0 : i32
    %c0_i32_1 = arith.constant 0 : i32
    return %arg0, %c0_i32, %c0_i32_0 : i32, i32, i32
  }
  func.func @transform_6(%arg0: i32, %arg1: i32) -> (i32, i32) {
    %c0_i32 = arith.constant 0 : i32
    %c0_i32_0 = arith.constant 0 : i32
    %c0_i32_1 = arith.constant 0 : i32
    return %c0_i32, %c0_i32_0 : i32, i32
  }
  func.func @transform_7(%arg0: i32, %arg1: i32) -> (i32, i32) {
    %c0_i32 = arith.constant 0 : i32
    %c0_i32_0 = arith.constant 0 : i32
    %c0_i32_1 = arith.constant 0 : i32
    return %c0_i32, %c0_i32_0 : i32, i32
  }
  func.func @transform_8(%arg0: i32, %arg1: i32) -> (i32, i32) {
    %c0_i32 = arith.constant 0 : i32
    %c0_i32_0 = arith.constant 0 : i32
    %c0_i32_1 = arith.constant 0 : i32
    return %c0_i32, %c0_i32_0 : i32, i32
  }
}

</mosaic_0001>

<llo_original>
// kernel: tpu_custom_call.1
$region0: #{tpu_custom_call.1}
  #allocation0 [shape = 'u32[]', space=smem, size = 0x4, offset = 0x4, fixed_abs, tag = 'smem constant byte address 0x4 - core index']
  #allocation1 [shape = 'u32[144,128]{1,0:T(1,128)}', space=vmem, size = 0x12000, scoped, tag = 'internal scratch']
  #allocation2 [shape = 'bf16[128,128]{1,0:T(16,128)(2,1)}', space=vmem, size = 0x8000, scoped, tag = 'scratch operand']
  #allocation3 [shape = 'f32[128,128]{1,0:T(8,128)}', space=vmem, size = 0x10000, scoped, tag = 'scratch operand']
  #allocation4 [shape = 'bf16[128,128]{1,0:T(16,128)(2,1)}', space=vmem, size = 0x8000, scoped, tag = 'scratch operand']
  #allocation5 [shape = 'f32[128,128]{1,0:T(8,128)}', space=vmem, size = 0x10000, scoped, tag = 'scratch operand']
  #allocation6 [shape = 'bf16[128,256]{1,0:T(16,128)(2,1)}', space=vmem, size = 0x10000, scoped, tag = 'scratch operand']
  %s0 = inlined_call_operand.hbm [shape: bf16[128,128], index: 0, kind: input, shape index: {}]
  %s1 = inlined_call_operand.hbm [shape: bf16[128,128], index: 1, kind: input, shape index: {}]
  %s2 = inlined_call_operand.hbm [shape: bf16[128,128], index: 2, kind: input, shape index: {}]
  %s3 = inlined_call_operand.hbm [shape: bf16[128,128], index: 3, kind: input, shape index: {}]
  %s4 = inlined_call_operand.vmem [shape: bf16[8,128], index: 4, kind: input, shape index: {}]
  %s5 = inlined_call_operand.hbm [shape: bf16[2,256,128], index: 5, kind: input, shape index: {}]
  %s6 = inlined_call_operand.hbm [shape: bf16[128,128], index: 6, kind: input, shape index: {}]
  %s7 = inlined_call_operand.vmem [shape: f32[1,128], index: 7, kind: input, shape index: {}]
  %s8 = inlined_call_operand.hbm [shape: f32[8,128], index: 8, kind: output, shape index: {}]
  %s9 = sld [smem:[#allocation0]]
  $region113: #{tpu_custom_call.1} parent=0
    _
  %s11 = ssub.s32 1, %s9
  %s12 = scalar_select 0, %s11, %s9
  $region1: #{tpu_custom_call.1} parent=0
    #allocation7 [shape = 'u8[32768]{0}', space=vmem, size = 0x8000, scoped, tag = 'input window, operand 0, single buffered']
    #allocation8 [shape = 's32[2]{0}', space=sflag, size = 0x8, scoped, tag = 'scoped memory for tpu_custom_call.1']
    #allocation9 [shape = 's32[2]{0}', space=sflag, size = 0x8, scoped, tag = 'scoped memory for tpu_custom_call.1']
    #allocation10 [shape = 'u8[32768]{0}', space=vmem, size = 0x8000, scoped, tag = 'input window, operand 1, single buffered']
    #allocation11 [shape = 's32[1]{0}', space=sflag, size = 0x4, scoped, tag = 'scoped memory for tpu_custom_call.1']
    #allocation12 [shape = 'u8[32768]{0}', space=vmem, size = 0x8000, scoped, tag = 'input window, operand 2, single buffered']
    #allocation13 [shape = 'u8[65536]{0}', space=vmem, size = 0x10000, scoped, tag = 'input window, operand 3']
    #allocation14 [shape = 's32[2]{0}', space=sflag, size = 0x8, scoped, tag = 'scoped memory for tpu_custom_call.1']
    #allocation15 [shape = 'u8[131072]{0}', space=vmem, size = 0x20000, scoped, tag = 'input window, operand 5']
    #allocation16 [shape = 'u8[32768]{0}', space=vmem, size = 0x8000, scoped, tag = 'input window, operand 6, single buffered']
    #allocation17 [shape = 's32[1]{0}', space=sflag, size = 0x4, scoped, tag = 'scoped memory for tpu_custom_call.1']
    #allocation18 [shape = 'u8[4096]{0}', space=vmem, size = 0x1000, scoped, tag = 'output window, operand 0, single buffered']
    %13 = vsyncpa [#allocation8], 0
    %14 = vsyncpa [#allocation11], 0
    %15 = vsyncpa [#allocation14], 0
    %s16 = scalar_lea.sflag [#allocation14], 1
    %17 = vsyncpa %s16, 0
    %18 = vsyncpa [#allocation17], 0
    %19 = vsyncpa [#allocation9], 0
    loop: start=0, step=1, limit=4
    $region2: #{tpu_custom_call.1} parent=1 // loop_pre_header
      _
    $region3: #{tpu_custom_call.1} parent=1 // loop_header
      %s21 = sphi 0, %s25
      %p22 = scmp.ge.s32.totalorder %s21, 4
      %s28 = sphi 0, %s40
      %s29 = sphi 0, %s36
      %s30 = sphi 0, %s28
      %s31 = sphi 0, %s29
      %s32 = sphi 0, %s30
      %s33 = sphi 0, %s31
      %s41 = sphi 0, %s41
      %s43 = sphi 0, %s41
      %s44 = sphi 0, %s43
      %s58 = sphi 0, %s44
      %s64 = sphi 0, %s66
      %s67 = sphi 0, %s64
      %s68 = sphi 0, %s67
      %s84 = sphi 0, %s68
      %s90 = sphi 0, %s92
      %s93 = sphi 0, %s90
      %s94 = sphi 0, %s93
      %s110 = sphi 0, %s94
      %s120 = sphi 0, %s122
      %s123 = sphi 0, %s120
      %s124 = sphi 0, %s123
      %s140 = sphi 0, %s124
      %s144 = sphi 0, %s144
      %s146 = sphi 0, %s144
      %s147 = sphi 0, %s146
      %s161 = sphi 0, %s147
      %s167 = sphi 0, %s169
      %s170 = sphi 0, %s167
      %s171 = sphi 0, %s170
      %s187 = sphi 0, %s171
      %s191 = sphi 0, %s191
      %s193 = sphi 0, %s191
      %s194 = sphi 0, %s193
      %s208 = sphi 0, %s194
      %s212 = sphi 0, %s212
      %s214 = sphi 0, %s212
      %s215 = sphi 0, %s214
      %s229 = sphi 0, %s215
      %s233 = sphi 0, %s233
      %s235 = sphi 0, %s233
      %s236 = sphi 0, %s235
      %s250 = sphi 0, %s236
    $region4: #{tpu_custom_call.1} parent=1 // loop_header_branch
      %24 = sbr.rel (%p22) target = $region8
    $region5: #{tpu_custom_call.1} parent=1 // loop_body
      %s26 = ssub.s32 %s21, 1
      %s27 = ssub.s32 %s21, 2
      %s34 = sadd.s32 1, %s29
      %p35 = scmp.ge.s32.totalorder %s34, 1
      %s36 = scalar_select %p35, 0, %s34
      %s37 = sadd.s32 1, %s28
      %s38 = scalar_select %p35, %s37, %s28
      %p39 = scmp.ge.s32.totalorder %s38, 2
      %s40 = scalar_select %p39, 0, %s38
      %s42 = sadd.s32 %s41, 1
      %p45 = scmp.eq.s32.totalorder %s21, 1
      %p46 = scmp.ne.s32.totalorder %s41, %s43
      %p47 = scmp.eq.s32.totalorder %s21, 0
      %p48 = por %p46, %p47
      %p49 = scmp.ne.s32.totalorder %s41, %s43
      %p50 = scmp.eq.s32.totalorder %s26, 1
      %p51 = por %p49, %p50
      %p52 = scmp.ne.s32.totalorder %s43, %s44
      %p53 = scmp.eq.s32.totalorder %s26, 0
      %p54 = por %p52, %p53
      %p55 = scmp.ne.s32.totalorder %s43, %s44
      %p56 = scmp.eq.s32.totalorder %s27, 1
      %p57 = por %p55, %p56
      %p59 = scmp.ne.s32.totalorder %s44, %s58
      %p60 = scmp.eq.s32.totalorder %s27, 0
      %p61 = por %p59, %p60
      %s62 = ssub.s32 %s29, %s36
      %p63 = scmp.eq.s32.totalorder %s62, 0
      %s65 = sadd.s32 %s64, 1
      %s66 = scalar_select %p63, %s64, %s65
      %p69 = pneg %p63
      %p70 = scmp.eq.s32.totalorder %s21, 1
      %p71 = por %p69, %p70
      %p72 = scmp.ne.s32.totalorder %s64, %s67
      %p73 = scmp.eq.s32.totalorder %s21, 0
      %p74 = por %p72, %p73
      %p75 = scmp.ne.s32.totalorder %s64, %s67
      %p76 = scmp.eq.s32.totalorder %s26, 1
      %p77 = por %p75, %p76
      %p78 = scmp.ne.s32.totalorder %s67, %s68
      %p79 = scmp.eq.s32.totalorder %s26, 0
      %p80 = por %p78, %p79
      %p81 = scmp.ne.s32.totalorder %s67, %s68
      %p82 = scmp.eq.s32.totalorder %s27, 1
      %p83 = por %p81, %p82
      %p85 = scmp.ne.s32.totalorder %s68, %s84
      %p86 = scmp.eq.s32.totalorder %s27, 0
      %p87 = por %p85, %p86
      %s88 = ssub.s32 %s29, %s36
      %p89 = scmp.eq.s32.totalorder %s88, 0
      %s91 = sadd.s32 %s90, 1
      %s92 = scalar_select %p89, %s90, %s91
      %p95 = pneg %p89
      %p96 = scmp.eq.s32.totalorder %s21, 1
      %p97 = por %p95, %p96
      %p98 = scmp.ne.s32.totalorder %s90, %s93
      %p99 = scmp.eq.s32.totalorder %s21, 0
      %p100 = por %p98, %p99
      %p101 = scmp.ne.s32.totalorder %s90, %s93
      %p102 = scmp.eq.s32.totalorder %s26, 1
      %p103 = por %p101, %p102
      %p104 = scmp.ne.s32.totalorder %s93, %s94
      %p105 = scmp.eq.s32.totalorder %s26, 0
      %p106 = por %p104, %p105
      %p107 = scmp.ne.s32.totalorder %s93, %s94
      %p108 = scmp.eq.s32.totalorder %s27, 1
      %p109 = por %p107, %p108
      %p111 = scmp.ne.s32.totalorder %s94, %s110
      %p112 = scmp.eq.s32.totalorder %s27, 0
      %p113 = por %p111, %p112
      %p114 = scmp.eq.s32.totalorder %s28, 0
      %s115 = scalar_select %p114, %s29, 0
      %p116 = scmp.eq.s32.totalorder %s40, 0
      %s117 = scalar_select %p116, %s36, 0
      %s118 = ssub.s32 %s115, %s117
      %p119 = scmp.eq.s32.totalorder %s118, 0
      %s121 = sadd.s32 %s120, 1
      %s122 = scalar_select %p119, %s120, %s121
      %p125 = pneg %p119
      %p126 = scmp.eq.s32.totalorder %s21, 1
      %p127 = por %p125, %p126
      %p128 = scmp.ne.s32.totalorder %s120, %s123
      %p129 = scmp.eq.s32.totalorder %s21, 0
      %p130 = por %p128, %p129
      %p131 = scmp.ne.s32.totalorder %s120, %s123
      %p132 = scmp.eq.s32.totalorder %s26, 1
      %p133 = por %p131, %p132
      %p134 = scmp.ne.s32.totalorder %s123, %s124
      %p135 = scmp.eq.s32.totalorder %s26, 0
      %p136 = por %p134, %p135
      %p137 = scmp.ne.s32.totalorder %s123, %s124
      %p138 = scmp.eq.s32.totalorder %s27, 1
      %p139 = por %p137, %p138
      %p141 = scmp.ne.s32.totalorder %s124, %s140
      %p142 = scmp.eq.s32.totalorder %s27, 0
      %p143 = por %p141, %p142
      %s145 = sadd.s32 %s144, 1
      %p148 = scmp.eq.s32.totalorder %s21, 1
      %p149 = scmp.ne.s32.totalorder %s144, %s146
      %p150 = scmp.eq.s32.totalorder %s21, 0
      %p151 = por %p149, %p150
      %p152 = scmp.ne.s32.totalorder %s144, %s146
      %p153 = scmp.eq.s32.totalorder %s26, 1
      %p154 = por %p152, %p153
      %p155 = scmp.ne.s32.totalorder %s146, %s147
      %p156 = scmp.eq.s32.totalorder %s26, 0
      %p157 = por %p155, %p156
      %p158 = scmp.ne.s32.totalorder %s146, %s147
      %p159 = scmp.eq.s32.totalorder %s27, 1
      %p160 = por %p158, %p159
      %p162 = scmp.ne.s32.totalorder %s147, %s161
      %p163 = scmp.eq.s32.totalorder %s27, 0
      %p164 = por %p162, %p163
      %s165 = ssub.s32 %s28, %s40
      %p166 = scmp.eq.s32.totalorder %s165, 0
      %s168 = sadd.s32 %s167, 1
      %s169 = scalar_select %p166, %s167, %s168
      %p172 = pneg %p166
      %p173 = scmp.eq.s32.totalorder %s21, 1
      %p174 = por %p172, %p173
      %p175 = scmp.ne.s32.totalorder %s167, %s170
      %p176 = scmp.eq.s32.totalorder %s21, 0
      %p177 = por %p175, %p176
      %p178 = scmp.ne.s32.totalorder %s167, %s170
      %p179 = scmp.eq.s32.totalorder %s26, 1
      %p180 = por %p178, %p179
      %p181 = scmp.ne.s32.totalorder %s170, %s171
      %p182 = scmp.eq.s32.totalorder %s26, 0
      %p183 = por %p181, %p182
      %p184 = scmp.ne.s32.totalorder %s170, %s171
      %p185 = scmp.eq.s32.totalorder %s27, 1
      %p186 = por %p184, %p185
      %p188 = scmp.ne.s32.totalorder %s171, %s187
      %p189 = scmp.eq.s32.totalorder %s27, 0
      %p190 = por %p188, %p189
      %s192 = sadd.s32 %s191, 1
      %p195 = scmp.eq.s32.totalorder %s21, 1
      %p196 = scmp.ne.s32.totalorder %s191, %s193
      %p197 = scmp.eq.s32.totalorder %s21, 0
      %p198 = por %p196, %p197
      %p199 = scmp.ne.s32.totalorder %s191, %s193
      %p200 = scmp.eq.s32.totalorder %s26, 1
      %p201 = por %p199, %p200
      %p202 = scmp.ne.s32.totalorder %s193, %s194
      %p203 = scmp.eq.s32.totalorder %s26, 0
      %p204 = por %p202, %p203
      %p205 = scmp.ne.s32.totalorder %s193, %s194
      %p206 = scmp.eq.s32.totalorder %s27, 1
      %p207 = por %p205, %p206
      %p209 = scmp.ne.s32.totalorder %s194, %s208
      %p210 = scmp.eq.s32.totalorder %s27, 0
      %p211 = por %p209, %p210
      %s213 = sadd.s32 %s212, 1
      %p216 = scmp.eq.s32.totalorder %s21, 1
      %p217 = scmp.ne.s32.totalorder %s212, %s214
      %p218 = scmp.eq.s32.totalorder %s21, 0
      %p219 = por %p217, %p218
      %p220 = scmp.ne.s32.totalorder %s212, %s214
      %p221 = scmp.eq.s32.totalorder %s26, 1
      %p222 = por %p220, %p221
      %p223 = scmp.ne.s32.totalorder %s214, %s215
      %p224 = scmp.eq.s32.totalorder %s26, 0
      %p225 = por %p223, %p224
      %p226 = scmp.ne.s32.totalorder %s214, %s215
      %p227 = scmp.eq.s32.totalorder %s27, 1
      %p228 = por %p226, %p227
      %p230 = scmp.ne.s32.totalorder %s215, %s229
      %p231 = scmp.eq.s32.totalorder %s27, 0
      %p232 = por %p230, %p231
      %s234 = sadd.s32 %s233, 1
      %p237 = scmp.eq.s32.totalorder %s21, 1
      %p238 = scmp.ne.s32.totalorder %s233, %s235
      %p239 = scmp.eq.s32.totalorder %s21, 0
      %p240 = por %p238, %p239
      %p241 = scmp.ne.s32.totalorder %s233, %s235
      %p242 = scmp.eq.s32.totalorder %s26, 1
      %p243 = por %p241, %p242
      %p244 = scmp.ne.s32.totalorder %s235, %s236
      %p245 = scmp.eq.s32.totalorder %s26, 0
      %p246 = por %p244, %p245
      %p247 = scmp.ne.s32.totalorder %s235, %s236
      %p248 = scmp.eq.s32.totalorder %s27, 1
      %p249 = por %p247, %p248
      %p251 = scmp.ne.s32.totalorder %s236, %s250
      %p252 = scmp.eq.s32.totalorder %s27, 0
      %p253 = por %p251, %p252
      %p254 = scmp.le.s32.totalorder 1, %s21
      %p255 = scmp.lt.s32.totalorder %s21, 3
      %p256 = pnand %p254, %p255
      %p257 = pneg %p256
      // Predicated region
      $region9: #{tpu_custom_call.1} parent=5 // pred_check
        _
      $region10: #{tpu_custom_call.1} parent=5 // pred_check_branch
        %259 = sbr.rel (%p256) target = $region12
      $region11: #{tpu_custom_call.1} parent=5 // pred_region
        %s260 = ssub.s32 %s21, 1
        // Predicated region
        $region13: #{tpu_custom_call.1} parent=11 // pred_check
          %p261 = pneg %p54
        $region14: #{tpu_custom_call.1} parent=11 // pred_check_branch
          %263 = sbr.rel (%p261) target = $region16
        $region15: #{tpu_custom_call.1} parent=11 // pred_region
          %s265 = ssub.s32 1024, 1024
          %266 = vsyncadd [#allocation8], %s265
          %s267 = sshll.u32 [#allocation7], 4
          %s268 = int_to_ptr.vmem [resolvable:$true] %s267
          %273 = dma.hbm_to_vmem [thread:$0]  %s0, 1024, %s268, [#allocation8], 64, 64, 4
        $region16: #{tpu_custom_call.1} parent=11 // pred_fallthru
          _
        // Predicated region
        $region17: #{tpu_custom_call.1} parent=11 // pred_check
          %p274 = pneg %p80
        $region18: #{tpu_custom_call.1} parent=11 // pred_check_branch
          %276 = sbr.rel (%p274) target = $region20
        $region19: #{tpu_custom_call.1} parent=11 // pred_region
          %s278 = ssub.s32 1024, 1024
          %279 = vsyncadd [#allocation11], %s278
          %s280 = smul.addr %s31, 64
          %s281 = scalar_lea.hbm %s1, %s280
          %s282 = sshll.u32 [#allocation10], 4
          %s283 = int_to_ptr.vmem [resolvable:$true] %s282
          %288 = dma.hbm_to_vmem [thread:$0]  %s281, 1024, %s283, [#allocation11], 64, 64, 4
        $region20: #{tpu_custom_call.1} parent=11 // pred_fallthru
          _
        // Predicated region
        $region21: #{tpu_custom_call.1} parent=11 // pred_check
          %p289 = pneg %p106
        $region22: #{tpu_custom_call.1} parent=11 // pred_check_branch
          %291 = sbr.rel (%p289) target = $region24
        $region23: #{tpu_custom_call.1} parent=11 // pred_region
          %s292 = smul.u32 16, %s31
          %s294 = ssub.s32 1024, 1024
          %295 = vsyncadd [#allocation11], %s294
          %s296 = smul.addr %s292, 64
          %s297 = scalar_lea.hbm %s2, %s296
          %s298 = sshll.u32 [#allocation12], 4
          %s299 = int_to_ptr.vmem [resolvable:$true] %s298
          %304 = dma.hbm_to_vmem [thread:$0]  %s297, 1024, %s299, [#allocation11], 64, 64, 4
        $region24: #{tpu_custom_call.1} parent=11 // pred_fallthru
          _
        // Predicated region
        $region25: #{tpu_custom_call.1} parent=11 // pred_check
          %p305 = pneg %p157
        $region26: #{tpu_custom_call.1} parent=11 // pred_check_branch
          %307 = sbr.rel (%p305) target = $region28
        $region27: #{tpu_custom_call.1} parent=11 // pred_region
          _
        $region28: #{tpu_custom_call.1} parent=11 // pred_fallthru
          _
        // Predicated region
        $region29: #{tpu_custom_call.1} parent=11 // pred_check
          %p308 = pneg %p204
        $region30: #{tpu_custom_call.1} parent=11 // pred_check_branch
          %310 = sbr.rel (%p308) target = $region32
        $region31: #{tpu_custom_call.1} parent=11 // pred_region
          %s312 = ssub.s32 1024, 1024
          %313 = vsyncadd [#allocation17], %s312
          %s314 = sshll.u32 [#allocation16], 4
          %s315 = int_to_ptr.vmem [resolvable:$true] %s314
          %320 = dma.hbm_to_vmem [thread:$0]  %s6, 1024, %s315, [#allocation17], 64, 64, 4
        $region32: #{tpu_custom_call.1} parent=11 // pred_fallthru
          _
        // Predicated region
        $region33: #{tpu_custom_call.1} parent=11 // pred_check
          %p321 = pneg %p225
        $region34: #{tpu_custom_call.1} parent=11 // pred_check_branch
          %323 = sbr.rel (%p321) target = $region36
        $region35: #{tpu_custom_call.1} parent=11 // pred_region
          _
        $region36: #{tpu_custom_call.1} parent=11 // pred_fallthru
          _
      $region12: #{tpu_custom_call.1} parent=5 // pred_fallthru
        _
      %p324 = scmp.lt.s32.totalorder %s21, 2
      // Predicated region
      $region37: #{tpu_custom_call.1} parent=5 // pred_check
        %p325 = pneg %p324
      $region38: #{tpu_custom_call.1} parent=5 // pred_check_branch
        %327 = sbr.rel (%p325) target = $region40
      $region39: #{tpu_custom_call.1} parent=5 // pred_region
        // Predicated region
        $region41: #{tpu_custom_call.1} parent=39 // pred_check
          %p328 = pneg %p130
        $region42: #{tpu_custom_call.1} parent=39 // pred_check_branch
          %330 = sbr.rel (%p328) target = $region44
        $region43: #{tpu_custom_call.1} parent=39 // pred_region
          %s331 = sand.u32 %s21, 1
          %s332 = scalar_lea.sflag [#allocation14], %s331
          %s333 = sand.u32 %s120, 1
          %s334 = smul.addr %s333, 64
          %s335 = scalar_lea.vmem [#allocation13], %s334
          %p336 = scmp.eq.s32.totalorder %s28, 0
          %s337 = scalar_select %p336, %s29, 0
          %s338 = smul.u32 16, %s337
          %s340 = ssub.s32 1024, 1024
          %341 = vsyncadd %s332, %s340
          %s342 = smul.addr %s338, 64
          %s343 = scalar_lea.hbm %s3, %s342
          %s344 = sshll.u32 %s335, 4
          %s345 = int_to_ptr.vmem [resolvable:$true] %s344
          %350 = dma.hbm_to_vmem [thread:$0]  %s343, 1024, %s345, %s332, 64, 64, 4
        $region44: #{tpu_custom_call.1} parent=39 // pred_fallthru
          _
        // Predicated region
        $region45: #{tpu_custom_call.1} parent=39 // pred_check
          %p351 = pneg %p177
        $region46: #{tpu_custom_call.1} parent=39 // pred_check_branch
          %353 = sbr.rel (%p351) target = $region48
        $region47: #{tpu_custom_call.1} parent=39 // pred_region
          %s354 = sand.u32 %s21, 1
          %s355 = scalar_lea.sflag [#allocation14], %s354
          %s356 = sand.u32 %s167, 1
          %s357 = smul.addr %s356, 128
          %s358 = scalar_lea.vmem [#allocation15], %s357
          %s360 = ssub.s32 2048, 2048
          %361 = vsyncadd %s355, %s360
          %s362 = smul.addr %s28, 32
          %s363 = smul.addr %s362, 64
          %s364 = scalar_lea.hbm %s5, %s363
          %s365 = sshll.u32 %s358, 4
          %s366 = int_to_ptr.vmem [resolvable:$true] %s365
          %371 = dma.hbm_to_vmem [thread:$0]  %s364, 2048, %s366, %s355, 64, 64, 4
        $region48: #{tpu_custom_call.1} parent=39 // pred_fallthru
          _
      $region40: #{tpu_custom_call.1} parent=5 // pred_fallthru
        _
      %p372 = scmp.le.s32.totalorder 1, %s21
      %p373 = scmp.lt.s32.totalorder %s21, 3
      %p374 = pnand %p372, %p373
      %p375 = pneg %p374
      // Predicated region
      $region49: #{tpu_custom_call.1} parent=5 // pred_check
        _
      $region50: #{tpu_custom_call.1} parent=5 // pred_check_branch
        %377 = sbr.rel (%p374) target = $region52
      $region51: #{tpu_custom_call.1} parent=5 // pred_region
        %s378 = ssub.s32 %s21, 1
        // Predicated region
        $region53: #{tpu_custom_call.1} parent=51 // pred_check
          %p379 = pneg %p54
        $region54: #{tpu_custom_call.1} parent=51 // pred_check_branch
          %381 = sbr.rel (%p379) target = $region56
        $region55: #{tpu_custom_call.1} parent=51 // pred_region
          %382 = dma.done [#allocation8], 1024
        $region56: #{tpu_custom_call.1} parent=51 // pred_fallthru
          _
        // Predicated region
        $region57: #{tpu_custom_call.1} parent=51 // pred_check
          %p383 = pneg %p80
        $region58: #{tpu_custom_call.1} parent=51 // pred_check_branch
          %385 = sbr.rel (%p383) target = $region60
        $region59: #{tpu_custom_call.1} parent=51 // pred_region
          %386 = dma.done [#allocation11], 1024
        $region60: #{tpu_custom_call.1} parent=51 // pred_fallthru
          _
        // Predicated region
        $region61: #{tpu_custom_call.1} parent=51 // pred_check
          %p387 = pneg %p106
        $region62: #{tpu_custom_call.1} parent=51 // pred_check_branch
          %389 = sbr.rel (%p387) target = $region64
        $region63: #{tpu_custom_call.1} parent=51 // pred_region
          %390 = dma.done [#allocation11], 1024
        $region64: #{tpu_custom_call.1} parent=51 // pred_fallthru
          _
        %s391 = sand.u32 %s26, 1
        %s392 = scalar_lea.sflag [#allocation14], %s391
        %s393 = sand.u32 %s123, 1
        %s394 = smul.addr %s393, 64
        %s395 = scalar_lea.vmem [#allocation13], %s394
        // Predicated region
        $region65: #{tpu_custom_call.1} parent=51 // pred_check
          %p396 = pneg %p136
        $region66: #{tpu_custom_call.1} parent=51 // pred_check_branch
          %398 = sbr.rel (%p396) target = $region68
        $region67: #{tpu_custom_call.1} parent=51 // pred_region
          %399 = dma.done %s392, 1024
        $region68: #{tpu_custom_call.1} parent=51 // pred_fallthru
          _
        %s400 = sand.u32 %s26, 1
        %s401 = scalar_lea.sflag [#allocation14], %s400
        %s402 = sand.u32 %s170, 1
        %s403 = smul.addr %s402, 128
        %s404 = scalar_lea.vmem [#allocation15], %s403
        // Predicated region
        $region69: #{tpu_custom_call.1} parent=51 // pred_check
          %p405 = pneg %p183
        $region70: #{tpu_custom_call.1} parent=51 // pred_check_branch
          %407 = sbr.rel (%p405) target = $region72
        $region71: #{tpu_custom_call.1} parent=51 // pred_region
          %408 = dma.done %s401, 2048
        $region72: #{tpu_custom_call.1} parent=51 // pred_fallthru
          _
        // Predicated region
        $region73: #{tpu_custom_call.1} parent=51 // pred_check
          %p409 = pneg %p204
        $region74: #{tpu_custom_call.1} parent=51 // pred_check_branch
          %411 = sbr.rel (%p409) target = $region76
        $region75: #{tpu_custom_call.1} parent=51 // pred_region
          %412 = dma.done [#allocation17], 1024
        $region76: #{tpu_custom_call.1} parent=51 // pred_fallthru
          _
        %p413 = pneg %p54
        %p414 = pneg %p51
        %p415 = pneg %p80
        %p416 = pneg %p77
        %p417 = pneg %p106
        %p418 = pneg %p103
        %s419 = sand.u32 %s26, 1
        %s420 = scalar_lea.sflag [#allocation14], %s419
        %s421 = sand.u32 %s123, 1
        %s422 = smul.addr %s421, 64
        %s423 = scalar_lea.vmem [#allocation13], %s422
        %p424 = pneg %p136
        %p425 = pneg %p133
        %p426 = pneg %p157
        %p427 = pneg %p154
        %s428 = sand.u32 %s26, 1
        %s429 = scalar_lea.sflag [#allocation14], %s428
        %s430 = sand.u32 %s170, 1
        %s431 = smul.addr %s430, 128
        %s432 = scalar_lea.vmem [#allocation15], %s431
        %p433 = pneg %p183
        %p434 = pneg %p180
        %p435 = pneg %p204
        %p436 = pneg %p201
        %p437 = pneg %p225
        %p438 = pneg %p222
        %p439 = pneg %p246
        %p440 = pneg %p243
        %s441 = smul.u32 16, %s31
        %p442 = scmp.eq.s32.totalorder %s30, 0
        %s443 = scalar_select %p442, %s31, 0
        %s444 = smul.u32 16, %s443
        %p446 = scmp.eq.s32.totalorder %s30, 0
        %p447 = scmp.eq.s32.totalorder %s31, 0
        %p448 = pnand %p446, %p447
        %p449 = pneg %p448
        // Predicated region
        $region77: #{tpu_custom_call.1} parent=51 // pred_check
          _
        $region78: #{tpu_custom_call.1} parent=51 // pred_check_branch
          %451 = sbr.rel (%p448) target = $region80
        $region79: #{tpu_custom_call.1} parent=51 // pred_region
          %v452 = vld [vmem:[#allocation7] sm:$0xf]
          %v453 = vld [vmem:[#allocation7 + $0x4] sm:$0xf]
          %v454 = vld [vmem:[#allocation7 + $0x8] sm:$0xf]
          %v455 = vld [vmem:[#allocation7 + $0xc] sm:$0xf]
          %v456 = vld [vmem:[#allocation7 + $0x10] sm:$0xf]
          %v457 = vld [vmem:[#allocation7 + $0x14] sm:$0xf]
          %v458 = vld [vmem:[#allocation7 + $0x18] sm:$0xf]
          %v459 = vld [vmem:[#allocation7 + $0x1c] sm:$0xf]
          %v460 = vld [vmem:[#allocation7 + $0x20] sm:$0xf]
          %v461 = vld [vmem:[#allocation7 + $0x24] sm:$0xf]
          %v462 = vld [vmem:[#allocation7 + $0x28] sm:$0xf]
          %v463 = vld [vmem:[#allocation7 + $0x2c] sm:$0xf]
          %v464 = vld [vmem:[#allocation7 + $0x30] sm:$0xf]
          %v465 = vld [vmem:[#allocation7 + $0x34] sm:$0xf]
          %v466 = vld [vmem:[#allocation7 + $0x38] sm:$0xf]
          %v467 = vld [vmem:[#allocation7 + $0x3c] sm:$0xf]
          %v484 = vunpack.c.l.b16 %v452
          %v485 = vunpack.c.l.b16 %v453
          %v486 = vunpack.c.l.b16 %v454
          %v487 = vunpack.c.l.b16 %v455
          %v488 = vunpack.c.l.b16 %v456
          %v489 = vunpack.c.l.b16 %v457
          %v490 = vunpack.c.l.b16 %v458
          %v491 = vunpack.c.l.b16 %v459
          %v492 = vunpack.c.l.b16 %v460
          %v493 = vunpack.c.l.b16 %v461
          %v494 = vunpack.c.l.b16 %v462
          %v495 = vunpack.c.l.b16 %v463
          %v496 = vunpack.c.l.b16 %v464
          %v497 = vunpack.c.l.b16 %v465
          %v498 = vunpack.c.l.b16 %v466
          %v499 = vunpack.c.l.b16 %v467
          %v500 = vpack.c.b16 %v485, %v484
          %v501 = vpack.c.b16 %v487, %v486
          %v502 = vpack.c.b16 %v489, %v488
          %v503 = vpack.c.b16 %v491, %v490
          %v504 = vpack.c.b16 %v493, %v492
          %v505 = vpack.c.b16 %v495, %v494
          %v506 = vpack.c.b16 %v497, %v496
          %v507 = vpack.c.b16 %v499, %v498
          %516 = vst [vmem:[#allocation2] sm:$0xff] %v500
          %517 = vst [vmem:[#allocation2 + $0x8] sm:$0xff] %v501
          %518 = vst [vmem:[#allocation2 + $0x10] sm:$0xff] %v502
          %519 = vst [vmem:[#allocation2 + $0x18] sm:$0xff] %v503
          %520 = vst [vmem:[#allocation2 + $0x20] sm:$0xff] %v504
          %521 = vst [vmem:[#allocation2 + $0x28] sm:$0xff] %v505
          %522 = vst [vmem:[#allocation2 + $0x30] sm:$0xff] %v506
          %523 = vst [vmem:[#allocation2 + $0x38] sm:$0xff] %v507
          %524 = vst [vmem:[#allocation3] sm:$0xff] 0.0
          %525 = vst [vmem:[#allocation3 + $0x8] sm:$0xff] 0.0
          %526 = vst [vmem:[#allocation3 + $0x10] sm:$0xff] 0.0
          %527 = vst [vmem:[#allocation3 + $0x18] sm:$0xff] 0.0
          %528 = vst [vmem:[#allocation3 + $0x20] sm:$0xff] 0.0
          %529 = vst [vmem:[#allocation3 + $0x28] sm:$0xff] 0.0
          %530 = vst [vmem:[#allocation3 + $0x30] sm:$0xff] 0.0
          %531 = vst [vmem:[#allocation3 + $0x38] sm:$0xff] 0.0
          %532 = vst [vmem:[#allocation3 + $0x40] sm:$0xff] 0.0
          %533 = vst [vmem:[#allocation3 + $0x48] sm:$0xff] 0.0
          %534 = vst [vmem:[#allocation3 + $0x50] sm:$0xff] 0.0
          %535 = vst [vmem:[#allocation3 + $0x58] sm:$0xff] 0.0
          %536 = vst [vmem:[#allocation3 + $0x60] sm:$0xff] 0.0
          %537 = vst [vmem:[#allocation3 + $0x68] sm:$0xff] 0.0
          %538 = vst [vmem:[#allocation3 + $0x70] sm:$0xff] 0.0
          %539 = vst [vmem:[#allocation3 + $0x78] sm:$0xff] 0.0
        $region80: #{tpu_custom_call.1} parent=51 // pred_fallthru
          _
        // Predicated region
        $region81: #{tpu_custom_call.1} parent=51 // pred_check
          %p540 = pneg %p447
        $region82: #{tpu_custom_call.1} parent=51 // pred_check_branch
          %542 = sbr.rel (%p540) target = $region84
        $region83: #{tpu_custom_call.1} parent=51 // pred_region
          %543 = vst [vmem:[#allocation5] sm:$0xff] 0.0
          %544 = vst [vmem:[#allocation5 + $0x8] sm:$0xff] 0.0
          %545 = vst [vmem:[#allocation5 + $0x10] sm:$0xff] 0.0
          %546 = vst [vmem:[#allocation5 + $0x18] sm:$0xff] 0.0
          %547 = vst [vmem:[#allocation5 + $0x20] sm:$0xff] 0.0
          %548 = vst [vmem:[#allocation5 + $0x28] sm:$0xff] 0.0
          %549 = vst [vmem:[#allocation5 + $0x30] sm:$0xff] 0.0
          %550 = vst [vmem:[#allocation5 + $0x38] sm:$0xff] 0.0
          %551 = vst [vmem:[#allocation5 + $0x40] sm:$0xff] 0.0
          %552 = vst [vmem:[#allocation5 + $0x48] sm:$0xff] 0.0
          %553 = vst [vmem:[#allocation5 + $0x50] sm:$0xff] 0.0
          %554 = vst [vmem:[#allocation5 + $0x58] sm:$0xff] 0.0
          %555 = vst [vmem:[#allocation5 + $0x60] sm:$0xff] 0.0
          %556 = vst [vmem:[#allocation5 + $0x68] sm:$0xff] 0.0
          %557 = vst [vmem:[#allocation5 + $0x70] sm:$0xff] 0.0
          %558 = vst [vmem:[#allocation5 + $0x78] sm:$0xff] 0.0
        $region84: #{tpu_custom_call.1} parent=51 // pred_fallthru
          _
        %v559 = vld [vmem:[#allocation2] sm:$0xff]
        %v560 = vld [vmem:[#allocation2 + $0x8] sm:$0xff]
        %v561 = vld [vmem:[#allocation2 + $0x10] sm:$0xff]
        %v562 = vld [vmem:[#allocation2 + $0x18] sm:$0xff]
        %v563 = vld [vmem:[#allocation2 + $0x20] sm:$0xff]
        %v564 = vld [vmem:[#allocation2 + $0x28] sm:$0xff]
        %v565 = vld [vmem:[#allocation2 + $0x30] sm:$0xff]
        %v566 = vld [vmem:[#allocation2 + $0x38] sm:$0xff]
        %v567 = vld [vmem:[#allocation12] sm:$0xf]
        %v568 = vld [vmem:[#allocation12 + $0x4] sm:$0xf]
        %v569 = vld [vmem:[#allocation12 + $0x8] sm:$0xf]
        %v570 = vld [vmem:[#allocation12 + $0xc] sm:$0xf]
        %v571 = vld [vmem:[#allocation12 + $0x10] sm:$0xf]
        %v572 = vld [vmem:[#allocation12 + $0x14] sm:$0xf]
        %v573 = vld [vmem:[#allocation12 + $0x18] sm:$0xf]
        %v574 = vld [vmem:[#allocation12 + $0x1c] sm:$0xf]
        %v575 = vld [vmem:[#allocation12 + $0x20] sm:$0xf]
        %v576 = vld [vmem:[#allocation12 + $0x24] sm:$0xf]
        %v577 = vld [vmem:[#allocation12 + $0x28] sm:$0xf]
        %v578 = vld [vmem:[#allocation12 + $0x2c] sm:$0xf]
        %v579 = vld [vmem:[#allocation12 + $0x30] sm:$0xf]
        %v580 = vld [vmem:[#allocation12 + $0x34] sm:$0xf]
        %v581 = vld [vmem:[#allocation12 + $0x38] sm:$0xf]
        %v582 = vld [vmem:[#allocation12 + $0x3c] sm:$0xf]
        %v599 = vunpack.c.l.b16 %v567
        %v600 = vunpack.c.l.b16 %v568
        %v601 = vunpack.c.l.b16 %v569
        %v602 = vunpack.c.l.b16 %v570
        %v603 = vunpack.c.l.b16 %v571
        %v604 = vunpack.c.l.b16 %v572
        %v605 = vunpack.c.l.b16 %v573
        %v606 = vunpack.c.l.b16 %v574
        %v607 = vunpack.c.l.b16 %v575
        %v608 = vunpack.c.l.b16 %v576
        %v609 = vunpack.c.l.b16 %v577
        %v610 = vunpack.c.l.b16 %v578
        %v611 = vunpack.c.l.b16 %v579
        %v612 = vunpack.c.l.b16 %v580
        %v613 = vunpack.c.l.b16 %v581
        %v614 = vunpack.c.l.b16 %v582
        %v615 = vpack.c.b16 %v600, %v599
        %v616 = vpack.c.b16 %v602, %v601
        %v617 = vpack.c.b16 %v604, %v603
        %v618 = vpack.c.b16 %v606, %v605
        %v619 = vpack.c.b16 %v608, %v607
        %v620 = vpack.c.b16 %v610, %v609
        %v621 = vpack.c.b16 %v612, %v611
        %v622 = vpack.c.b16 %v614, %v613
        %631 = vmatprep.subr.bf16.mxu0 0
        %632 = vmatpush1.bf16.msra.mxu0 %v559
        %633 = vmatprep.subr.bf16.mxu0 0
        %634 = vmatpush1.bf16.msra.mxu0 %v560
        %635 = vmatprep.subr.bf16.mxu0 0
        %636 = vmatpush1.bf16.msra.mxu0 %v561
        %637 = vmatprep.subr.bf16.mxu0 0
        %638 = vmatpush1.bf16.msra.mxu0 %v562
        %639 = vmatprep.subr.bf16.mxu0 0
        %640 = vmatpush1.bf16.msra.mxu0 %v563
        %641 = vmatprep.subr.bf16.mxu0 0
        %642 = vmatpush1.bf16.msra.mxu0 %v564
        %643 = vmatprep.subr.bf16.mxu0 0
        %644 = vmatpush1.bf16.msra.mxu0 %v565
        %645 = vmatprep.subr.bf16.mxu0 0
        %646 = vmatpush1.bf16.msra.mxu0 %v566
        %647 = vmatprep.subr.bf16.mxu0 0
        %648 = vmatpush1.bf16.msra.mxu0 0
        %649 = vmatprep.subr.bf16.mxu0 0
        %650 = vmatpush1.bf16.msra.mxu0 0
        %651 = vmatprep.subr.bf16.mxu0 0
        %652 = vmatpush1.bf16.msra.mxu0 0
        %653 = vmatprep.subr.bf16.mxu0 0
        %654 = vmatpush1.bf16.msra.mxu0 0
        %655 = vmatprep.subr.bf16.mxu0 0
        %656 = vmatpush1.bf16.msra.mxu0 0
        %657 = vmatprep.subr.bf16.mxu0 0
        %658 = vmatpush1.bf16.msra.mxu0 0
        %659 = vmatprep.subr.bf16.mxu0 0
        %660 = vmatpush1.bf16.msra.mxu0 0
        %661 = vmatprep.subr.bf16.mxu0 0
        %662 = vmatpush1.bf16.msra.mxu0 0
        %663 = vmatprep.mubr.bf16.mxu0 0
        %664 = vmatmul.mubr.bf16.gmra.mrb[0].mxu0 %v615
        %v665 = vpop.f32.mrb[0].mxu0
        %v666 = vadd.f32 0.0, %v665
        %v667 = vpop.f32.mrb[0].mxu0
        %v668 = vpop.f32.mrb[0].mxu0
        %v669 = vadd.f32 0.0, %v668
        %v670 = vpop.f32.mrb[0].mxu0
        %671 = vmatprep.mubr.bf16.mxu0 0
        %672 = vmatmul.mubr.bf16.gmra.mrb[0].mxu0 %v616
        %v673 = vpop.f32.mrb[0].mxu0
        %v674 = vadd.f32 0.0, %v673
        %v675 = vpop.f32.mrb[0].mxu0
        %v676 = vpop.f32.mrb[0].mxu0
        %v677 = vadd.f32 0.0, %v676
        %v678 = vpop.f32.mrb[0].mxu0
        %679 = vmatprep.mubr.bf16.mxu0 0
        %680 = vmatmul.mubr.bf16.gmra.mrb[0].mxu0 %v617
        %v681 = vpop.f32.mrb[0].mxu0
        %v682 = vadd.f32 0.0, %v681
        %v683 = vpop.f32.mrb[0].mxu0
        %v684 = vpop.f32.mrb[0].mxu0
        %v685 = vadd.f32 0.0, %v684
        %v686 = vpop.f32.mrb[0].mxu0
        %687 = vmatprep.mubr.bf16.mxu0 0
        %688 = vmatmul.mubr.bf16.gmra.mrb[0].mxu0 %v618
        %v689 = vpop.f32.mrb[0].mxu0
        %v690 = vadd.f32 0.0, %v689
        %v691 = vpop.f32.mrb[0].mxu0
        %v692 = vpop.f32.mrb[0].mxu0
        %v693 = vadd.f32 0.0, %v692
        %v694 = vpop.f32.mrb[0].mxu0
        %695 = vmatprep.mubr.bf16.mxu0 0
        %696 = vmatmul.mubr.bf16.gmra.mrb[0].mxu0 %v619
        %v697 = vpop.f32.mrb[0].mxu0
        %v698 = vadd.f32 0.0, %v697
        %v699 = vpop.f32.mrb[0].mxu0
        %v700 = vpop.f32.mrb[0].mxu0
        %v701 = vadd.f32 0.0, %v700
        %v702 = vpop.f32.mrb[0].mxu0
        %703 = vmatprep.mubr.bf16.mxu0 0
        %704 = vmatmul.mubr.bf16.gmra.mrb[0].mxu0 %v620
        %v705 = vpop.f32.mrb[0].mxu0
        %v706 = vadd.f32 0.0, %v705
        %v707 = vpop.f32.mrb[0].mxu0
        %v708 = vpop.f32.mrb[0].mxu0
        %v709 = vadd.f32 0.0, %v708
        %v710 = vpop.f32.mrb[0].mxu0
        %711 = vmatprep.mubr.bf16.mxu0 0
        %712 = vmatmul.mubr.bf16.gmra.mrb[0].mxu0 %v621
        %v713 = vpop.f32.mrb[0].mxu0
        %v714 = vadd.f32 0.0, %v713
        %v715 = vpop.f32.mrb[0].mxu0
        %v716 = vpop.f32.mrb[0].mxu0
        %v717 = vadd.f32 0.0, %v716
        %v718 = vpop.f32.mrb[0].mxu0
        %719 = vmatprep.mubr.bf16.mxu0 0
        %720 = vmatmul.mubr.bf16.gmra.mrb[0].mxu0 %v622
        %v721 = vpop.f32.mrb[0].mxu0
        %v722 = vadd.f32 0.0, %v721
        %v723 = vpop.f32.mrb[0].mxu0
        %v724 = vpop.f32.mrb[0].mxu0
        %v725 = vadd.f32 0.0, %v724
        %v726 = vpop.f32.mrb[0].mxu0
        %727 = vdwg.mxu0
        %v728 = vld [vmem:[#allocation5] sm:$0xff]
        %v729 = vld [vmem:[#allocation5 + $0x8] sm:$0xff]
        %v730 = vld [vmem:[#allocation5 + $0x10] sm:$0xff]
        %v731 = vld [vmem:[#allocation5 + $0x18] sm:$0xff]
        %v732 = vld [vmem:[#allocation5 + $0x20] sm:$0xff]
        %v733 = vld [vmem:[#allocation5 + $0x28] sm:$0xff]
        %v734 = vld [vmem:[#allocation5 + $0x30] sm:$0xff]
        %v735 = vld [vmem:[#allocation5 + $0x38] sm:$0xff]
        %v736 = vld [vmem:[#allocation5 + $0x40] sm:$0xff]
        %v737 = vld [vmem:[#allocation5 + $0x48] sm:$0xff]
        %v738 = vld [vmem:[#allocation5 + $0x50] sm:$0xff]
        %v739 = vld [vmem:[#allocation5 + $0x58] sm:$0xff]
        %v740 = vld [vmem:[#allocation5 + $0x60] sm:$0xff]
        %v741 = vld [vmem:[#allocation5 + $0x68] sm:$0xff]
        %v742 = vld [vmem:[#allocation5 + $0x70] sm:$0xff]
        %v743 = vld [vmem:[#allocation5 + $0x78] sm:$0xff]
        %v744 = vld [vmem:[#allocation10] sm:$0xf]
        %v745 = vld [vmem:[#allocation10 + $0x4] sm:$0xf]
        %v746 = vld [vmem:[#allocation10 + $0x8] sm:$0xf]
        %v747 = vld [vmem:[#allocation10 + $0xc] sm:$0xf]
        %v748 = vld [vmem:[#allocation10 + $0x10] sm:$0xf]
        %v749 = vld [vmem:[#allocation10 + $0x14] sm:$0xf]
        %v750 = vld [vmem:[#allocation10 + $0x18] sm:$0xf]
        %v751 = vld [vmem:[#allocation10 + $0x1c] sm:$0xf]
        %v752 = vld [vmem:[#allocation10 + $0x20] sm:$0xf]
        %v753 = vld [vmem:[#allocation10 + $0x24] sm:$0xf]
        %v754 = vld [vmem:[#allocation10 + $0x28] sm:$0xf]
        %v755 = vld [vmem:[#allocation10 + $0x2c] sm:$0xf]
        %v756 = vld [vmem:[#allocation10 + $0x30] sm:$0xf]
        %v757 = vld [vmem:[#allocation10 + $0x34] sm:$0xf]
        %v758 = vld [vmem:[#allocation10 + $0x38] sm:$0xf]
        %v759 = vld [vmem:[#allocation10 + $0x3c] sm:$0xf]
        %v760 = vpack.c.bf16 %v669, %v666
        %v761 = vpack.c.bf16 %v677, %v674
        %v762 = vpack.c.bf16 %v685, %v682
        %v763 = vpack.c.bf16 %v693, %v690
        %v764 = vpack.c.bf16 %v701, %v698
        %v765 = vpack.c.bf16 %v709, %v706
        %v766 = vpack.c.bf16 %v717, %v714
        %v767 = vpack.c.bf16 %v725, %v722
        %v784 = vunpack.c.l.b16 %v744
        %v785 = vunpack.c.l.b16 %v745
        %v786 = vunpack.c.l.b16 %v746
        %v787 = vunpack.c.l.b16 %v747
        %v788 = vunpack.c.l.b16 %v748
        %v789 = vunpack.c.l.b16 %v749
        %v790 = vunpack.c.l.b16 %v750
        %v791 = vunpack.c.l.b16 %v751
        %v792 = vunpack.c.l.b16 %v752
        %v793 = vunpack.c.l.b16 %v753
        %v794 = vunpack.c.l.b16 %v754
        %v795 = vunpack.c.l.b16 %v755
        %v796 = vunpack.c.l.b16 %v756
        %v797 = vunpack.c.l.b16 %v757
        %v798 = vunpack.c.l.b16 %v758
        %v799 = vunpack.c.l.b16 %v759
        %v800 = vpack.c.b16 %v785, %v784
        %v801 = vpack.c.b16 %v787, %v786
        %v802 = vpack.c.b16 %v789, %v788
        %v803 = vpack.c.b16 %v791, %v790
        %v804 = vpack.c.b16 %v793, %v792
        %v805 = vpack.c.b16 %v795, %v794
        %v806 = vpack.c.b16 %v797, %v796
        %v807 = vpack.c.b16 %v799, %v798
        %816 = vmatprep.subr.bf16.mxu0 0
        %817 = vmatpush1.bf16.msra.mxu0 %v760
        %818 = vmatprep.subr.bf16.mxu0 0
        %819 = vmatpush1.bf16.msra.mxu0 %v761
        %820 = vmatprep.subr.bf16.mxu0 0
        %821 = vmatpush1.bf16.msra.mxu0 %v762
        %822 = vmatprep.subr.bf16.mxu0 0
        %823 = vmatpush1.bf16.msra.mxu0 %v763
        %824 = vmatprep.subr.bf16.mxu0 0
        %825 = vmatpush1.bf16.msra.mxu0 %v764
        %826 = vmatprep.subr.bf16.mxu0 0
        %827 = vmatpush1.bf16.msra.mxu0 %v765
        %828 = vmatprep.subr.bf16.mxu0 0
        %829 = vmatpush1.bf16.msra.mxu0 %v766
        %830 = vmatprep.subr.bf16.mxu0 0
        %831 = vmatpush1.bf16.msra.mxu0 %v767
        %832 = vmatprep.subr.bf16.mxu0 0
        %833 = vmatpush1.bf16.msra.mxu0 0
        %834 = vmatprep.subr.bf16.mxu0 0
        %835 = vmatpush1.bf16.msra.mxu0 0
        %836 = vmatprep.subr.bf16.mxu0 0
        %837 = vmatpush1.bf16.msra.mxu0 0
        %838 = vmatprep.subr.bf16.mxu0 0
        %839 = vmatpush1.bf16.msra.mxu0 0
        %840 = vmatprep.subr.bf16.mxu0 0
        %841 = vmatpush1.bf16.msra.mxu0 0
        %842 = vmatprep.subr.bf16.mxu0 0
        %843 = vmatpush1.bf16.msra.mxu0 0
        %844 = vmatprep.subr.bf16.mxu0 0
        %845 = vmatpush1.bf16.msra.mxu0 0
        %846 = vmatprep.subr.bf16.mxu0 0
        %847 = vmatpush1.bf16.msra.mxu0 0
        %848 = vmatprep.mubr.bf16.mxu0 0
        %849 = vmatmul.mubr.bf16.gmra.mrb[0].mxu0 %v800
        %v850 = vpop.f32.mrb[0].mxu0
        %v851 = vadd.f32 0.0, %v850
        %v852 = vpop.f32.mrb[0].mxu0
        %v853 = vpop.f32.mrb[0].mxu0
        %v854 = vadd.f32 0.0, %v853
        %v855 = vpop.f32.mrb[0].mxu0
        %856 = vmatprep.mubr.bf16.mxu0 0
        %857 = vmatmul.mubr.bf16.gmra.mrb[0].mxu0 %v801
        %v858 = vpop.f32.mrb[0].mxu0
        %v859 = vadd.f32 0.0, %v858
        %v860 = vpop.f32.mrb[0].mxu0
        %v861 = vpop.f32.mrb[0].mxu0
        %v862 = vadd.f32 0.0, %v861
        %v863 = vpop.f32.mrb[0].mxu0
        %864 = vmatprep.mubr.bf16.mxu0 0
        %865 = vmatmul.mubr.bf16.gmra.mrb[0].mxu0 %v802
        %v866 = vpop.f32.mrb[0].mxu0
        %v867 = vadd.f32 0.0, %v866
        %v868 = vpop.f32.mrb[0].mxu0
        %v869 = vpop.f32.mrb[0].mxu0
        %v870 = vadd.f32 0.0, %v869
        %v871 = vpop.f32.mrb[0].mxu0
        %872 = vmatprep.mubr.bf16.mxu0 0
        %873 = vmatmul.mubr.bf16.gmra.mrb[0].mxu0 %v803
        %v874 = vpop.f32.mrb[0].mxu0
        %v875 = vadd.f32 0.0, %v874
        %v876 = vpop.f32.mrb[0].mxu0
        %v877 = vpop.f32.mrb[0].mxu0
        %v878 = vadd.f32 0.0, %v877
        %v879 = vpop.f32.mrb[0].mxu0
        %880 = vmatprep.mubr.bf16.mxu0 0
        %881 = vmatmul.mubr.bf16.gmra.mrb[0].mxu0 %v804
        %v882 = vpop.f32.mrb[0].mxu0
        %v883 = vadd.f32 0.0, %v882
        %v884 = vpop.f32.mrb[0].mxu0
        %v885 = vpop.f32.mrb[0].mxu0
        %v886 = vadd.f32 0.0, %v885
        %v887 = vpop.f32.mrb[0].mxu0
        %888 = vmatprep.mubr.bf16.mxu0 0
        %889 = vmatmul.mubr.bf16.gmra.mrb[0].mxu0 %v805
        %v890 = vpop.f32.mrb[0].mxu0
        %v891 = vadd.f32 0.0, %v890
        %v892 = vpop.f32.mrb[0].mxu0
        %v893 = vpop.f32.mrb[0].mxu0
        %v894 = vadd.f32 0.0, %v893
        %v895 = vpop.f32.mrb[0].mxu0
        %896 = vmatprep.mubr.bf16.mxu0 0
        %897 = vmatmul.mubr.bf16.gmra.mrb[0].mxu0 %v806
        %v898 = vpop.f32.mrb[0].mxu0
        %v899 = vadd.f32 0.0, %v898
        %v900 = vpop.f32.mrb[0].mxu0
        %v901 = vpop.f32.mrb[0].mxu0
        %v902 = vadd.f32 0.0, %v901
        %v903 = vpop.f32.mrb[0].mxu0
        %904 = vmatprep.mubr.bf16.mxu0 0
        %905 = vmatmul.mubr.bf16.gmra.mrb[0].mxu0 %v807
        %v906 = vpop.f32.mrb[0].mxu0
        %v907 = vadd.f32 0.0, %v906
        %v908 = vpop.f32.mrb[0].mxu0
        %v909 = vpop.f32.mrb[0].mxu0
        %v910 = vadd.f32 0.0, %v909
        %v911 = vpop.f32.mrb[0].mxu0
        %912 = vdwg.mxu0
        %v913 = vadd.f32 %v728, %v851
        %v914 = vadd.f32 %v729, %v854
        %v915 = vadd.f32 %v730, %v859
        %v916 = vadd.f32 %v731, %v862
        %v917 = vadd.f32 %v732, %v867
        %v918 = vadd.f32 %v733, %v870
        %v919 = vadd.f32 %v734, %v875
        %v920 = vadd.f32 %v735, %v878
        %v921 = vadd.f32 %v736, %v883
        %v922 = vadd.f32 %v737, %v886
        %v923 = vadd.f32 %v738, %v891
        %v924 = vadd.f32 %v739, %v894
        %v925 = vadd.f32 %v740, %v899
        %v926 = vadd.f32 %v741, %v902
        %v927 = vadd.f32 %v742, %v907
        %v928 = vadd.f32 %v743, %v910
        %929 = vst [vmem:[#allocation5] sm:$0xff] %v913
        %930 = vst [vmem:[#allocation5 + $0x8] sm:$0xff] %v914
        %931 = vst [vmem:[#allocation5 + $0x10] sm:$0xff] %v915
        %932 = vst [vmem:[#allocation5 + $0x18] sm:$0xff] %v916
        %933 = vst [vmem:[#allocation5 + $0x20] sm:$0xff] %v917
        %934 = vst [vmem:[#allocation5 + $0x28] sm:$0xff] %v918
        %935 = vst [vmem:[#allocation5 + $0x30] sm:$0xff] %v919
        %936 = vst [vmem:[#allocation5 + $0x38] sm:$0xff] %v920
        %937 = vst [vmem:[#allocation5 + $0x40] sm:$0xff] %v921
        %938 = vst [vmem:[#allocation5 + $0x48] sm:$0xff] %v922
        %939 = vst [vmem:[#allocation5 + $0x50] sm:$0xff] %v923
        %940 = vst [vmem:[#allocation5 + $0x58] sm:$0xff] %v924
        %941 = vst [vmem:[#allocation5 + $0x60] sm:$0xff] %v925
        %942 = vst [vmem:[#allocation5 + $0x68] sm:$0xff] %v926
        %943 = vst [vmem:[#allocation5 + $0x70] sm:$0xff] %v927
        %944 = vst [vmem:[#allocation5 + $0x78] sm:$0xff] %v928
        // Predicated region
        $region85: #{tpu_custom_call.1} parent=51 // pred_check
          %p945 = pneg %p446
        $region86: #{tpu_custom_call.1} parent=51 // pred_check_branch
          %947 = sbr.rel (%p945) target = $region88
        $region87: #{tpu_custom_call.1} parent=51 // pred_region
          %v948 = vld [vmem:[#allocation3] sm:$0xff]
          %v949 = vld [vmem:[#allocation3 + $0x8] sm:$0xff]
          %v950 = vld [vmem:[#allocation3 + $0x10] sm:$0xff]
          %v951 = vld [vmem:[#allocation3 + $0x18] sm:$0xff]
          %v952 = vld [vmem:[#allocation3 + $0x20] sm:$0xff]
          %v953 = vld [vmem:[#allocation3 + $0x28] sm:$0xff]
          %v954 = vld [vmem:[#allocation3 + $0x30] sm:$0xff]
          %v955 = vld [vmem:[#allocation3 + $0x38] sm:$0xff]
          %v956 = vld [vmem:[#allocation3 + $0x40] sm:$0xff]
          %v957 = vld [vmem:[#allocation3 + $0x48] sm:$0xff]
          %v958 = vld [vmem:[#allocation3 + $0x50] sm:$0xff]
          %v959 = vld [vmem:[#allocation3 + $0x58] sm:$0xff]
          %v960 = vld [vmem:[#allocation3 + $0x60] sm:$0xff]
          %v961 = vld [vmem:[#allocation3 + $0x68] sm:$0xff]
          %v962 = vld [vmem:[#allocation3 + $0x70] sm:$0xff]
          %v963 = vld [vmem:[#allocation3 + $0x78] sm:$0xff]
          %v964 = vld [vmem:[#allocation10] sm:$0xf]
          %v965 = vld [vmem:[#allocation10 + $0x4] sm:$0xf]
          %v966 = vld [vmem:[#allocation10 + $0x8] sm:$0xf]
          %v967 = vld [vmem:[#allocation10 + $0xc] sm:$0xf]
          %v968 = vld [vmem:[#allocation10 + $0x10] sm:$0xf]
          %v969 = vld [vmem:[#allocation10 + $0x14] sm:$0xf]
          %v970 = vld [vmem:[#allocation10 + $0x18] sm:$0xf]
          %v971 = vld [vmem:[#allocation10 + $0x1c] sm:$0xf]
          %v972 = vld [vmem:[#allocation10 + $0x20] sm:$0xf]
          %v973 = vld [vmem:[#allocation10 + $0x24] sm:$0xf]
          %v974 = vld [vmem:[#allocation10 + $0x28] sm:$0xf]
          %v975 = vld [vmem:[#allocation10 + $0x2c] sm:$0xf]
          %v976 = vld [vmem:[#allocation10 + $0x30] sm:$0xf]
          %v977 = vld [vmem:[#allocation10 + $0x34] sm:$0xf]
          %v978 = vld [vmem:[#allocation10 + $0x38] sm:$0xf]
          %v979 = vld [vmem:[#allocation10 + $0x3c] sm:$0xf]
          %v980 = vld [vmem:[%s395] sm:$0xf]
          %v981 = vld [vmem:[%s395 + $0x4] sm:$0xf]
          %v982 = vld [vmem:[%s395 + $0x8] sm:$0xf]
          %v983 = vld [vmem:[%s395 + $0xc] sm:$0xf]
          %v984 = vld [vmem:[%s395 + $0x10] sm:$0xf]
          %v985 = vld [vmem:[%s395 + $0x14] sm:$0xf]
          %v986 = vld [vmem:[%s395 + $0x18] sm:$0xf]
          %v987 = vld [vmem:[%s395 + $0x1c] sm:$0xf]
          %v988 = vld [vmem:[%s395 + $0x20] sm:$0xf]
          %v989 = vld [vmem:[%s395 + $0x24] sm:$0xf]
          %v990 = vld [vmem:[%s395 + $0x28] sm:$0xf]
          %v991 = vld [vmem:[%s395 + $0x2c] sm:$0xf]
          %v992 = vld [vmem:[%s395 + $0x30] sm:$0xf]
          %v993 = vld [vmem:[%s395 + $0x34] sm:$0xf]
          %v994 = vld [vmem:[%s395 + $0x38] sm:$0xf]
          %v995 = vld [vmem:[%s395 + $0x3c] sm:$0xf]
          %v1012 = vunpack.c.l.b16 %v964
          %v1013 = vunpack.c.l.b16 %v965
          %v1014 = vunpack.c.l.b16 %v966
          %v1015 = vunpack.c.l.b16 %v967
          %v1016 = vunpack.c.l.b16 %v968
          %v1017 = vunpack.c.l.b16 %v969
          %v1018 = vunpack.c.l.b16 %v970
          %v1019 = vunpack.c.l.b16 %v971
          %v1020 = vunpack.c.l.b16 %v972
          %v1021 = vunpack.c.l.b16 %v973
          %v1022 = vunpack.c.l.b16 %v974
          %v1023 = vunpack.c.l.b16 %v975
          %v1024 = vunpack.c.l.b16 %v976
          %v1025 = vunpack.c.l.b16 %v977
          %v1026 = vunpack.c.l.b16 %v978
          %v1027 = vunpack.c.l.b16 %v979
          %v1028 = vpack.c.b16 %v1013, %v1012
          %v1029 = vpack.c.b16 %v1015, %v1014
          %v1030 = vpack.c.b16 %v1017, %v1016
          %v1031 = vpack.c.b16 %v1019, %v1018
          %v1032 = vpack.c.b16 %v1021, %v1020
          %v1033 = vpack.c.b16 %v1023, %v1022
          %v1034 = vpack.c.b16 %v1025, %v1024
          %v1035 = vpack.c.b16 %v1027, %v1026
          %v1060 = vunpack.c.l.b16 %v980
          %v1061 = vunpack.c.l.b16 %v981
          %v1062 = vunpack.c.l.b16 %v982
          %v1063 = vunpack.c.l.b16 %v983
          %v1064 = vunpack.c.l.b16 %v984
          %v1065 = vunpack.c.l.b16 %v985
          %v1066 = vunpack.c.l.b16 %v986
          %v1067 = vunpack.c.l.b16 %v987
          %v1068 = vunpack.c.l.b16 %v988
          %v1069 = vunpack.c.l.b16 %v989
          %v1070 = vunpack.c.l.b16 %v990
          %v1071 = vunpack.c.l.b16 %v991
          %v1072 = vunpack.c.l.b16 %v992
          %v1073 = vunpack.c.l.b16 %v993
          %v1074 = vunpack.c.l.b16 %v994
          %v1075 = vunpack.c.l.b16 %v995
          %v1076 = vpack.c.b16 %v1061, %v1060
          %v1077 = vpack.c.b16 %v1063, %v1062
          %v1078 = vpack.c.b16 %v1065, %v1064
          %v1079 = vpack.c.b16 %v1067, %v1066
          %v1080 = vpack.c.b16 %v1069, %v1068
          %v1081 = vpack.c.b16 %v1071, %v1070
          %v1082 = vpack.c.b16 %v1073, %v1072
          %v1083 = vpack.c.b16 %v1075, %v1074
          %1092 = vmatprep.subr.bf16.mxu0 0
          %1093 = vmatpush1.bf16.msra.mxu0 %v1076
          %1094 = vmatprep.subr.bf16.mxu0 0
          %1095 = vmatpush1.bf16.msra.mxu0 %v1077
          %1096 = vmatprep.subr.bf16.mxu0 0
          %1097 = vmatpush1.bf16.msra.mxu0 %v1078
          %1098 = vmatprep.subr.bf16.mxu0 0
          %1099 = vmatpush1.bf16.msra.mxu0 %v1079
          %1100 = vmatprep.subr.bf16.mxu0 0
          %1101 = vmatpush1.bf16.msra.mxu0 %v1080
          %1102 = vmatprep.subr.bf16.mxu0 0
          %1103 = vmatpush1.bf16.msra.mxu0 %v1081
          %1104 = vmatprep.subr.bf16.mxu0 0
          %1105 = vmatpush1.bf16.msra.mxu0 %v1082
          %1106 = vmatprep.subr.bf16.mxu0 0
          %1107 = vmatpush1.bf16.msra.mxu0 %v1083
          %1108 = vmatprep.subr.bf16.mxu0 0
          %1109 = vmatpush1.bf16.msra.mxu0 0
          %1110 = vmatprep.subr.bf16.mxu0 0
          %1111 = vmatpush1.bf16.msra.mxu0 0
          %1112 = vmatprep.subr.bf16.mxu0 0
          %1113 = vmatpush1.bf16.msra.mxu0 0
          %1114 = vmatprep.subr.bf16.mxu0 0
          %1115 = vmatpush1.bf16.msra.mxu0 0
          %1116 = vmatprep.subr.bf16.mxu0 0
          %1117 = vmatpush1.bf16.msra.mxu0 0
          %1118 = vmatprep.subr.bf16.mxu0 0
          %1119 = vmatpush1.bf16.msra.mxu0 0
          %1120 = vmatprep.subr.bf16.mxu0 0
          %1121 = vmatpush1.bf16.msra.mxu0 0
          %1122 = vmatprep.subr.bf16.mxu0 0
          %1123 = vmatpush1.bf16.msra.mxu0 0
          %1124 = vmatprep.mubr.bf16.mxu0 0
          %1125 = vmatmul.mubr.bf16.gmra.mrb[0].mxu0 %v1028
          %v1126 = vpop.f32.mrb[0].mxu0
          %v1127 = vadd.f32 0.0, %v1126
          %v1128 = vpop.f32.mrb[0].mxu0
          %v1129 = vpop.f32.mrb[0].mxu0
          %v1130 = vadd.f32 0.0, %v1129
          %v1131 = vpop.f32.mrb[0].mxu0
          %1132 = vmatprep.mubr.bf16.mxu0 0
          %1133 = vmatmul.mubr.bf16.gmra.mrb[0].mxu0 %v1029
          %v1134 = vpop.f32.mrb[0].mxu0
          %v1135 = vadd.f32 0.0, %v1134
          %v1136 = vpop.f32.mrb[0].mxu0
          %v1137 = vpop.f32.mrb[0].mxu0
          %v1138 = vadd.f32 0.0, %v1137
          %v1139 = vpop.f32.mrb[0].mxu0
          %1140 = vmatprep.mubr.bf16.mxu0 0
          %1141 = vmatmul.mubr.bf16.gmra.mrb[0].mxu0 %v1030
          %v1142 = vpop.f32.mrb[0].mxu0
          %v1143 = vadd.f32 0.0, %v1142
          %v1144 = vpop.f32.mrb[0].mxu0
          %v1145 = vpop.f32.mrb[0].mxu0
          %v1146 = vadd.f32 0.0, %v1145
          %v1147 = vpop.f32.mrb[0].mxu0
          %1148 = vmatprep.mubr.bf16.mxu0 0
          %1149 = vmatmul.mubr.bf16.gmra.mrb[0].mxu0 %v1031
          %v1150 = vpop.f32.mrb[0].mxu0
          %v1151 = vadd.f32 0.0, %v1150
          %v1152 = vpop.f32.mrb[0].mxu0
          %v1153 = vpop.f32.mrb[0].mxu0
          %v1154 = vadd.f32 0.0, %v1153
          %v1155 = vpop.f32.mrb[0].mxu0
          %1156 = vmatprep.mubr.bf16.mxu0 0
          %1157 = vmatmul.mubr.bf16.gmra.mrb[0].mxu0 %v1032
          %v1158 = vpop.f32.mrb[0].mxu0
          %v1159 = vadd.f32 0.0, %v1158
          %v1160 = vpop.f32.mrb[0].mxu0
          %v1161 = vpop.f32.mrb[0].mxu0
          %v1162 = vadd.f32 0.0, %v1161
          %v1163 = vpop.f32.mrb[0].mxu0
          %1164 = vmatprep.mubr.bf16.mxu0 0
          %1165 = vmatmul.mubr.bf16.gmra.mrb[0].mxu0 %v1033
          %v1166 = vpop.f32.mrb[0].mxu0
          %v1167 = vadd.f32 0.0, %v1166
          %v1168 = vpop.f32.mrb[0].mxu0
          %v1169 = vpop.f32.mrb[0].mxu0
          %v1170 = vadd.f32 0.0, %v1169
          %v1171 = vpop.f32.mrb[0].mxu0
          %1172 = vmatprep.mubr.bf16.mxu0 0
          %1173 = vmatmul.mubr.bf16.gmra.mrb[0].mxu0 %v1034
          %v1174 = vpop.f32.mrb[0].mxu0
          %v1175 = vadd.f32 0.0, %v1174
          %v1176 = vpop.f32.mrb[0].mxu0
          %v1177 = vpop.f32.mrb[0].mxu0
          %v1178 = vadd.f32 0.0, %v1177
          %v1179 = vpop.f32.mrb[0].mxu0
          %1180 = vmatprep.mubr.bf16.mxu0 0
          %1181 = vmatmul.mubr.bf16.gmra.mrb[0].mxu0 %v1035
          %v1182 = vpop.f32.mrb[0].mxu0
          %v1183 = vadd.f32 0.0, %v1182
          %v1184 = vpop.f32.mrb[0].mxu0
          %v1185 = vpop.f32.mrb[0].mxu0
          %v1186 = vadd.f32 0.0, %v1185
          %v1187 = vpop.f32.mrb[0].mxu0
          %1188 = vdwg.mxu0
          %v1189 = vadd.f32 %v948, %v1127
          %v1190 = vadd.f32 %v949, %v1130
          %v1191 = vadd.f32 %v950, %v1135
          %v1192 = vadd.f32 %v951, %v1138
          %v1193 = vadd.f32 %v952, %v1143
          %v1194 = vadd.f32 %v953, %v1146
          %v1195 = vadd.f32 %v954, %v1151
          %v1196 = vadd.f32 %v955, %v1154
          %v1197 = vadd.f32 %v956, %v1159
          %v1198 = vadd.f32 %v957, %v1162
          %v1199 = vadd.f32 %v958, %v1167
          %v1200 = vadd.f32 %v959, %v1170
          %v1201 = vadd.f32 %v960, %v1175
          %v1202 = vadd.f32 %v961, %v1178
          %v1203 = vadd.f32 %v962, %v1183
          %v1204 = vadd.f32 %v963, %v1186
          %1205 = vst [vmem:[#allocation3] sm:$0xff] %v1189
          %1206 = vst [vmem:[#allocation3 + $0x8] sm:$0xff] %v1190
          %1207 = vst [vmem:[#allocation3 + $0x10] sm:$0xff] %v1191
          %1208 = vst [vmem:[#allocation3 + $0x18] sm:$0xff] %v1192
          %1209 = vst [vmem:[#allocation3 + $0x20] sm:$0xff] %v1193
          %1210 = vst [vmem:[#allocation3 + $0x28] sm:$0xff] %v1194
          %1211 = vst [vmem:[#allocation3 + $0x30] sm:$0xff] %v1195
          %1212 = vst [vmem:[#allocation3 + $0x38] sm:$0xff] %v1196
          %1213 = vst [vmem:[#allocation3 + $0x40] sm:$0xff] %v1197
          %1214 = vst [vmem:[#allocation3 + $0x48] sm:$0xff] %v1198
          %1215 = vst [vmem:[#allocation3 + $0x50] sm:$0xff] %v1199
          %1216 = vst [vmem:[#allocation3 + $0x58] sm:$0xff] %v1200
          %1217 = vst [vmem:[#allocation3 + $0x60] sm:$0xff] %v1201
          %1218 = vst [vmem:[#allocation3 + $0x68] sm:$0xff] %v1202
          %1219 = vst [vmem:[#allocation3 + $0x70] sm:$0xff] %v1203
          %1220 = vst [vmem:[#allocation3 + $0x78] sm:$0xff] %v1204
        $region88: #{tpu_custom_call.1} parent=51 // pred_fallthru
          _
        // Predicated region
        $region89: #{tpu_custom_call.1} parent=51 // pred_check
          %p1221 = pneg %p447
        $region90: #{tpu_custom_call.1} parent=51 // pred_check_branch
          %1223 = sbr.rel (%p1221) target = $region92
        $region91: #{tpu_custom_call.1} parent=51 // pred_region
          // Predicated region
          $region93: #{tpu_custom_call.1} parent=91 // pred_check
            %p1224 = pneg %p446
          $region94: #{tpu_custom_call.1} parent=91 // pred_check_branch
            %1226 = sbr.rel (%p1224) target = $region96
          $region95: #{tpu_custom_call.1} parent=91 // pred_region
            %v1227 = vld [vmem:[#allocation3] sm:$0xff]
            %v1228 = vld [vmem:[#allocation3 + $0x8] sm:$0xff]
            %v1229 = vld [vmem:[#allocation3 + $0x10] sm:$0xff]
            %v1230 = vld [vmem:[#allocation3 + $0x18] sm:$0xff]
            %v1231 = vld [vmem:[#allocation3 + $0x20] sm:$0xff]
            %v1232 = vld [vmem:[#allocation3 + $0x28] sm:$0xff]
            %v1233 = vld [vmem:[#allocation3 + $0x30] sm:$0xff]
            %v1234 = vld [vmem:[#allocation3 + $0x38] sm:$0xff]
            %v1235 = vld [vmem:[#allocation3 + $0x40] sm:$0xff]
            %v1236 = vld [vmem:[#allocation3 + $0x48] sm:$0xff]
            %v1237 = vld [vmem:[#allocation3 + $0x50] sm:$0xff]
            %v1238 = vld [vmem:[#allocation3 + $0x58] sm:$0xff]
            %v1239 = vld [vmem:[#allocation3 + $0x60] sm:$0xff]
            %v1240 = vld [vmem:[#allocation3 + $0x68] sm:$0xff]
            %v1241 = vld [vmem:[#allocation3 + $0x70] sm:$0xff]
            %v1242 = vld [vmem:[#allocation3 + $0x78] sm:$0xff]
            %v1243 = vpack.c.bf16 %v1228, %v1227
            %v1244 = vpack.c.bf16 %v1230, %v1229
            %v1245 = vpack.c.bf16 %v1232, %v1231
            %v1246 = vpack.c.bf16 %v1234, %v1233
            %v1247 = vpack.c.bf16 %v1236, %v1235
            %v1248 = vpack.c.bf16 %v1238, %v1237
            %v1249 = vpack.c.bf16 %v1240, %v1239
            %v1250 = vpack.c.bf16 %v1242, %v1241
            %1251 = vst [vmem:[#allocation4] sm:$0xff] %v1243
            %1252 = vst [vmem:[#allocation4 + $0x8] sm:$0xff] %v1244
            %1253 = vst [vmem:[#allocation4 + $0x10] sm:$0xff] %v1245
            %1254 = vst [vmem:[#allocation4 + $0x18] sm:$0xff] %v1246
            %1255 = vst [vmem:[#allocation4 + $0x20] sm:$0xff] %v1247
            %1256 = vst [vmem:[#allocation4 + $0x28] sm:$0xff] %v1248
            %1257 = vst [vmem:[#allocation4 + $0x30] sm:$0xff] %v1249
            %1258 = vst [vmem:[#allocation4 + $0x38] sm:$0xff] %v1250
          $region96: #{tpu_custom_call.1} parent=91 // pred_fallthru
            _
          %v1259 = vld [vmem:[#allocation5] sm:$0xff]
          %v1260 = vld [vmem:[#allocation5 + $0x8] sm:$0xff]
          %v1261 = vld [vmem:[#allocation5 + $0x10] sm:$0xff]
          %v1262 = vld [vmem:[#allocation5 + $0x18] sm:$0xff]
          %v1263 = vld [vmem:[#allocation5 + $0x20] sm:$0xff]
          %v1264 = vld [vmem:[#allocation5 + $0x28] sm:$0xff]
          %v1265 = vld [vmem:[#allocation5 + $0x30] sm:$0xff]
          %v1266 = vld [vmem:[#allocation5 + $0x38] sm:$0xff]
          %v1267 = vld [vmem:[#allocation5 + $0x40] sm:$0xff]
          %v1268 = vld [vmem:[#allocation5 + $0x48] sm:$0xff]
          %v1269 = vld [vmem:[#allocation5 + $0x50] sm:$0xff]
          %v1270 = vld [vmem:[#allocation5 + $0x58] sm:$0xff]
          %v1271 = vld [vmem:[#allocation5 + $0x60] sm:$0xff]
          %v1272 = vld [vmem:[#allocation5 + $0x68] sm:$0xff]
          %v1273 = vld [vmem:[#allocation5 + $0x70] sm:$0xff]
          %v1274 = vld [vmem:[#allocation5 + $0x78] sm:$0xff]
          %v1275 = vpack.c.bf16 %v1260, %v1259
          %v1276 = vpack.c.bf16 %v1262, %v1261
          %v1277 = vpack.c.bf16 %v1264, %v1263
          %v1278 = vpack.c.bf16 %v1266, %v1265
          %v1279 = vpack.c.bf16 %v1268, %v1267
          %v1280 = vpack.c.bf16 %v1270, %v1269
          %v1281 = vpack.c.bf16 %v1272, %v1271
          %v1282 = vpack.c.bf16 %v1274, %v1273
          %v1283 = vld [vmem:[#allocation4] sm:$0xff]
          %v1284 = vld [vmem:[#allocation4 + $0x8] sm:$0xff]
          %v1285 = vld [vmem:[#allocation4 + $0x10] sm:$0xff]
          %v1286 = vld [vmem:[#allocation4 + $0x18] sm:$0xff]
          %v1287 = vld [vmem:[#allocation4 + $0x20] sm:$0xff]
          %v1288 = vld [vmem:[#allocation4 + $0x28] sm:$0xff]
          %v1289 = vld [vmem:[#allocation4 + $0x30] sm:$0xff]
          %v1290 = vld [vmem:[#allocation4 + $0x38] sm:$0xff]
          %v1291 = vadd.bf16 %v1275, %v1283
          %v1292 = vadd.bf16 %v1276, %v1284
          %v1293 = vadd.bf16 %v1277, %v1285
          %v1294 = vadd.bf16 %v1278, %v1286
          %v1295 = vadd.bf16 %v1279, %v1287
          %v1296 = vadd.bf16 %v1280, %v1288
          %v1297 = vadd.bf16 %v1281, %v1289
          %v1298 = vadd.bf16 %v1282, %v1290
          %1299 = vst [vmem:[#allocation6] sm:$0xff] %v559
          %1300 = vst [vmem:[#allocation6 + $0x10] sm:$0xff] %v560
          %1301 = vst [vmem:[#allocation6 + $0x20] sm:$0xff] %v561
          %1302 = vst [vmem:[#allocation6 + $0x30] sm:$0xff] %v562
          %1303 = vst [vmem:[#allocation6 + $0x40] sm:$0xff] %v563
          %1304 = vst [vmem:[#allocation6 + $0x50] sm:$0xff] %v564
          %1305 = vst [vmem:[#allocation6 + $0x60] sm:$0xff] %v565
          %1306 = vst [vmem:[#allocation6 + $0x70] sm:$0xff] %v566
          %1307 = vst [vmem:[#allocation6 + $0x8] sm:$0xff] %v1291
          %1308 = vst [vmem:[#allocation6 + $0x18] sm:$0xff] %v1292
          %1309 = vst [vmem:[#allocation6 + $0x28] sm:$0xff] %v1293
          %1310 = vst [vmem:[#allocation6 + $0x38] sm:$0xff] %v1294
          %1311 = vst [vmem:[#allocation6 + $0x48] sm:$0xff] %v1295
          %1312 = vst [vmem:[#allocation6 + $0x58] sm:$0xff] %v1296
          %1313 = vst [vmem:[#allocation6 + $0x68] sm:$0xff] %v1297
          %1314 = vst [vmem:[#allocation6 + $0x78] sm:$0xff] %v1298
          %v1315 = vld [vmem:[#allocation6] sm:$0xff]
          %v1316 = vld [vmem:[#allocation6 + $0x8] sm:$0xff]
          %v1317 = vld [vmem:[#allocation6 + $0x10] sm:$0xff]
          %v1318 = vld [vmem:[#allocation6 + $0x18] sm:$0xff]
          %v1319 = vld [vmem:[#allocation6 + $0x20] sm:$0xff]
          %v1320 = vld [vmem:[#allocation6 + $0x28] sm:$0xff]
          %v1321 = vld [vmem:[#allocation6 + $0x30] sm:$0xff]
          %v1322 = vld [vmem:[#allocation6 + $0x38] sm:$0xff]
          %v1323 = vld [vmem:[#allocation6 + $0x40] sm:$0xff]
          %v1324 = vld [vmem:[#allocation6 + $0x48] sm:$0xff]
          %v1325 = vld [vmem:[#allocation6 + $0x50] sm:$0xff]
          %v1326 = vld [vmem:[#allocation6 + $0x58] sm:$0xff]
          %v1327 = vld [vmem:[#allocation6 + $0x60] sm:$0xff]
          %v1328 = vld [vmem:[#allocation6 + $0x68] sm:$0xff]
          %v1329 = vld [vmem:[#allocation6 + $0x70] sm:$0xff]
          %v1330 = vld [vmem:[#allocation6 + $0x78] sm:$0xff]
          %v1331 = vld [vmem:[%s404] sm:$0xf]
          %v1332 = vld [vmem:[%s404 + $0x4] sm:$0xf]
          %v1333 = vld [vmem:[%s404 + $0x8] sm:$0xf]
          %v1334 = vld [vmem:[%s404 + $0xc] sm:$0xf]
          %v1335 = vld [vmem:[%s404 + $0x10] sm:$0xf]
          %v1336 = vld [vmem:[%s404 + $0x14] sm:$0xf]
          %v1337 = vld [vmem:[%s404 + $0x18] sm:$0xf]
          %v1338 = vld [vmem:[%s404 + $0x1c] sm:$0xf]
          %v1339 = vld [vmem:[%s404 + $0x20] sm:$0xf]
          %v1340 = vld [vmem:[%s404 + $0x24] sm:$0xf]
          %v1341 = vld [vmem:[%s404 + $0x28] sm:$0xf]
          %v1342 = vld [vmem:[%s404 + $0x2c] sm:$0xf]
          %v1343 = vld [vmem:[%s404 + $0x30] sm:$0xf]
          %v1344 = vld [vmem:[%s404 + $0x34] sm:$0xf]
          %v1345 = vld [vmem:[%s404 + $0x38] sm:$0xf]
          %v1346 = vld [vmem:[%s404 + $0x3c] sm:$0xf]
          %v1347 = vld [vmem:[%s404 + $0x40] sm:$0xf]
          %v1348 = vld [vmem:[%s404 + $0x44] sm:$0xf]
          %v1349 = vld [vmem:[%s404 + $0x48] sm:$0xf]
          %v1350 = vld [vmem:[%s404 + $0x4c] sm:$0xf]
          %v1351 = vld [vmem:[%s404 + $0x50] sm:$0xf]
          %v1352 = vld [vmem:[%s404 + $0x54] sm:$0xf]
          %v1353 = vld [vmem:[%s404 + $0x58] sm:$0xf]
          %v1354 = vld [vmem:[%s404 + $0x5c] sm:$0xf]
          %v1355 = vld [vmem:[%s404 + $0x60] sm:$0xf]
          %v1356 = vld [vmem:[%s404 + $0x64] sm:$0xf]
          %v1357 = vld [vmem:[%s404 + $0x68] sm:$0xf]
          %v1358 = vld [vmem:[%s404 + $0x6c] sm:$0xf]
          %v1359 = vld [vmem:[%s404 + $0x70] sm:$0xf]
          %v1360 = vld [vmem:[%s404 + $0x74] sm:$0xf]
          %v1361 = vld [vmem:[%s404 + $0x78] sm:$0xf]
          %v1362 = vld [vmem:[%s404 + $0x7c] sm:$0xf]
          %v1395 = vunpack.c.l.b16 %v1331
          %v1396 = vunpack.c.l.b16 %v1332
          %v1397 = vunpack.c.l.b16 %v1333
          %v1398 = vunpack.c.l.b16 %v1334
          %v1399 = vunpack.c.l.b16 %v1335
          %v1400 = vunpack.c.l.b16 %v1336
          %v1401 = vunpack.c.l.b16 %v1337
          %v1402 = vunpack.c.l.b16 %v1338
          %v1403 = vunpack.c.l.b16 %v1339
          %v1404 = vunpack.c.l.b16 %v1340
          %v1405 = vunpack.c.l.b16 %v1341
          %v1406 = vunpack.c.l.b16 %v1342
          %v1407 = vunpack.c.l.b16 %v1343
          %v1408 = vunpack.c.l.b16 %v1344
          %v1409 = vunpack.c.l.b16 %v1345
          %v1410 = vunpack.c.l.b16 %v1346
          %v1411 = vunpack.c.l.b16 %v1347
          %v1412 = vunpack.c.l.b16 %v1348
          %v1413 = vunpack.c.l.b16 %v1349
          %v1414 = vunpack.c.l.b16 %v1350
          %v1415 = vunpack.c.l.b16 %v1351
          %v1416 = vunpack.c.l.b16 %v1352
          %v1417 = vunpack.c.l.b16 %v1353
          %v1418 = vunpack.c.l.b16 %v1354
          %v1419 = vunpack.c.l.b16 %v1355
          %v1420 = vunpack.c.l.b16 %v1356
          %v1421 = vunpack.c.l.b16 %v1357
          %v1422 = vunpack.c.l.b16 %v1358
          %v1423 = vunpack.c.l.b16 %v1359
          %v1424 = vunpack.c.l.b16 %v1360
          %v1425 = vunpack.c.l.b16 %v1361
          %v1426 = vunpack.c.l.b16 %v1362
          %v1427 = vpack.c.b16 %v1396, %v1395
          %v1428 = vpack.c.b16 %v1398, %v1397
          %v1429 = vpack.c.b16 %v1400, %v1399
          %v1430 = vpack.c.b16 %v1402, %v1401
          %v1431 = vpack.c.b16 %v1404, %v1403
          %v1432 = vpack.c.b16 %v1406, %v1405
          %v1433 = vpack.c.b16 %v1408, %v1407
          %v1434 = vpack.c.b16 %v1410, %v1409
          %v1435 = vpack.c.b16 %v1412, %v1411
          %v1436 = vpack.c.b16 %v1414, %v1413
          %v1437 = vpack.c.b16 %v1416, %v1415
          %v1438 = vpack.c.b16 %v1418, %v1417
          %v1439 = vpack.c.b16 %v1420, %v1419
          %v1440 = vpack.c.b16 %v1422, %v1421
          %v1441 = vpack.c.b16 %v1424, %v1423
          %v1442 = vpack.c.b16 %v1426, %v1425
          %1459 = vmatprep.subr.bf16.mxu0 0
          %1460 = vmatpush1.bf16.msra.mxu0 %v1427
          %1461 = vmatprep.subr.bf16.mxu0 0
          %1462 = vmatpush1.bf16.msra.mxu0 %v1428
          %1463 = vmatprep.subr.bf16.mxu0 0
          %1464 = vmatpush1.bf16.msra.mxu0 %v1429
          %1465 = vmatprep.subr.bf16.mxu0 0
          %1466 = vmatpush1.bf16.msra.mxu0 %v1430
          %1467 = vmatprep.subr.bf16.mxu0 0
          %1468 = vmatpush1.bf16.msra.mxu0 %v1431
          %1469 = vmatprep.subr.bf16.mxu0 0
          %1470 = vmatpush1.bf16.msra.mxu0 %v1432
          %1471 = vmatprep.subr.bf16.mxu0 0
          %1472 = vmatpush1.bf16.msra.mxu0 %v1433
          %1473 = vmatprep.subr.bf16.mxu0 0
          %1474 = vmatpush1.bf16.msra.mxu0 %v1434
          %1475 = vmatprep.subr.bf16.mxu0 0
          %1476 = vmatpush1.bf16.msra.mxu0 %v1435
          %1477 = vmatprep.subr.bf16.mxu0 0
          %1478 = vmatpush1.bf16.msra.mxu0 %v1436
          %1479 = vmatprep.subr.bf16.mxu0 0
          %1480 = vmatpush1.bf16.msra.mxu0 %v1437
          %1481 = vmatprep.subr.bf16.mxu0 0
          %1482 = vmatpush1.bf16.msra.mxu0 %v1438
          %1483 = vmatprep.subr.bf16.mxu0 0
          %1484 = vmatpush1.bf16.msra.mxu0 %v1439
          %1485 = vmatprep.subr.bf16.mxu0 0
          %1486 = vmatpush1.bf16.msra.mxu0 %v1440
          %1487 = vmatprep.subr.bf16.mxu0 0
          %1488 = vmatpush1.bf16.msra.mxu0 %v1441
          %1489 = vmatprep.subr.bf16.mxu0 0
          %1490 = vmatpush1.bf16.msra.mxu0 %v1442
          %1491 = vmatprep.mubr.bf16.mxu0 %v1316
          %1492 = vmatmul.mubr.bf16.gmra.mrb[0].mxu0 %v1315
          %v1493 = vpop.f32.mrb[0].mxu0
          %v1494 = vadd.f32 0.0, %v1493
          %v1495 = vpop.f32.mrb[0].mxu0
          %v1496 = vpop.f32.mrb[0].mxu0
          %v1497 = vadd.f32 0.0, %v1496
          %v1498 = vpop.f32.mrb[0].mxu0
          %1499 = vmatprep.mubr.bf16.mxu0 %v1318
          %1500 = vmatmul.mubr.bf16.gmra.mrb[0].mxu0 %v1317
          %v1501 = vpop.f32.mrb[0].mxu0
          %v1502 = vadd.f32 0.0, %v1501
          %v1503 = vpop.f32.mrb[0].mxu0
          %v1504 = vpop.f32.mrb[0].mxu0
          %v1505 = vadd.f32 0.0, %v1504
          %v1506 = vpop.f32.mrb[0].mxu0
          %1507 = vmatprep.mubr.bf16.mxu0 %v1320
          %1508 = vmatmul.mubr.bf16.gmra.mrb[0].mxu0 %v1319
          %v1509 = vpop.f32.mrb[0].mxu0
          %v1510 = vadd.f32 0.0, %v1509
          %v1511 = vpop.f32.mrb[0].mxu0
          %v1512 = vpop.f32.mrb[0].mxu0
          %v1513 = vadd.f32 0.0, %v1512
          %v1514 = vpop.f32.mrb[0].mxu0
          %1515 = vmatprep.mubr.bf16.mxu0 %v1322
          %1516 = vmatmul.mubr.bf16.gmra.mrb[0].mxu0 %v1321
          %v1517 = vpop.f32.mrb[0].mxu0
          %v1518 = vadd.f32 0.0, %v1517
          %v1519 = vpop.f32.mrb[0].mxu0
          %v1520 = vpop.f32.mrb[0].mxu0
          %v1521 = vadd.f32 0.0, %v1520
          %v1522 = vpop.f32.mrb[0].mxu0
          %1523 = vmatprep.mubr.bf16.mxu0 %v1324
          %1524 = vmatmul.mubr.bf16.gmra.mrb[0].mxu0 %v1323
          %v1525 = vpop.f32.mrb[0].mxu0
          %v1526 = vadd.f32 0.0, %v1525
          %v1527 = vpop.f32.mrb[0].mxu0
          %v1528 = vpop.f32.mrb[0].mxu0
          %v1529 = vadd.f32 0.0, %v1528
          %v1530 = vpop.f32.mrb[0].mxu0
          %1531 = vmatprep.mubr.bf16.mxu0 %v1326
          %1532 = vmatmul.mubr.bf16.gmra.mrb[0].mxu0 %v1325
          %v1533 = vpop.f32.mrb[0].mxu0
          %v1534 = vadd.f32 0.0, %v1533
          %v1535 = vpop.f32.mrb[0].mxu0
          %v1536 = vpop.f32.mrb[0].mxu0
          %v1537 = vadd.f32 0.0, %v1536
          %v1538 = vpop.f32.mrb[0].mxu0
          %1539 = vmatprep.mubr.bf16.mxu0 %v1328
          %1540 = vmatmul.mubr.bf16.gmra.mrb[0].mxu0 %v1327
          %v1541 = vpop.f32.mrb[0].mxu0
          %v1542 = vadd.f32 0.0, %v1541
          %v1543 = vpop.f32.mrb[0].mxu0
          %v1544 = vpop.f32.mrb[0].mxu0
          %v1545 = vadd.f32 0.0, %v1544
          %v1546 = vpop.f32.mrb[0].mxu0
          %1547 = vmatprep.mubr.bf16.mxu0 %v1330
          %1548 = vmatmul.mubr.bf16.gmra.mrb[0].mxu0 %v1329
          %v1549 = vpop.f32.mrb[0].mxu0
          %v1550 = vadd.f32 0.0, %v1549
          %v1551 = vpop.f32.mrb[0].mxu0
          %v1552 = vpop.f32.mrb[0].mxu0
          %v1553 = vadd.f32 0.0, %v1552
          %v1554 = vpop.f32.mrb[0].mxu0
          %1555 = vdwg.mxu0
          %v1556 = vmax.f32 %v1494, 0.0
          %v1557 = vmax.f32 %v1497, 0.0
          %v1558 = vmax.f32 %v1502, 0.0
          %v1559 = vmax.f32 %v1505, 0.0
          %v1560 = vmax.f32 %v1510, 0.0
          %v1561 = vmax.f32 %v1513, 0.0
          %v1562 = vmax.f32 %v1518, 0.0
          %v1563 = vmax.f32 %v1521, 0.0
          %v1564 = vmax.f32 %v1526, 0.0
          %v1565 = vmax.f32 %v1529, 0.0
          %v1566 = vmax.f32 %v1534, 0.0
          %v1567 = vmax.f32 %v1537, 0.0
          %v1568 = vmax.f32 %v1542, 0.0
          %v1569 = vmax.f32 %v1545, 0.0
          %v1570 = vmax.f32 %v1550, 0.0
          %v1571 = vmax.f32 %v1553, 0.0
          %v1572 = vpack.c.bf16 %v1557, %v1556
          %v1573 = vpack.c.bf16 %v1559, %v1558
          %v1574 = vpack.c.bf16 %v1561, %v1560
          %v1575 = vpack.c.bf16 %v1563, %v1562
          %v1576 = vpack.c.bf16 %v1565, %v1564
          %v1577 = vpack.c.bf16 %v1567, %v1566
          %v1578 = vpack.c.bf16 %v1569, %v1568
          %v1579 = vpack.c.bf16 %v1571, %v1570
          %1580 = vst [vmem:[#allocation2] sm:$0xff] %v1572
          %1581 = vst [vmem:[#allocation2 + $0x8] sm:$0xff] %v1573
          %1582 = vst [vmem:[#allocation2 + $0x10] sm:$0xff] %v1574
          %1583 = vst [vmem:[#allocation2 + $0x18] sm:$0xff] %v1575
          %1584 = vst [vmem:[#allocation2 + $0x20] sm:$0xff] %v1576
          %1585 = vst [vmem:[#allocation2 + $0x28] sm:$0xff] %v1577
          %1586 = vst [vmem:[#allocation2 + $0x30] sm:$0xff] %v1578
          %1587 = vst [vmem:[#allocation2 + $0x38] sm:$0xff] %v1579
          %p1588 = scmp.eq.s32.totalorder %s30, 1
          // Predicated region
          $region97: #{tpu_custom_call.1} parent=91 // pred_check
            %p1589 = pneg %p1588
          $region98: #{tpu_custom_call.1} parent=91 // pred_check_branch
            %1591 = sbr.rel (%p1589) target = $region100
          $region99: #{tpu_custom_call.1} parent=91 // pred_region
            %v1592 = vld [vmem:[%s4] sm:$0xf]
            %1593 = vmatprep.subr.bf16.mxu0 0
            %1594 = vmatpush1.bf16.msra.mxu0 %v1572
            %1595 = vmatprep.subr.bf16.mxu0 0
            %1596 = vmatpush1.bf16.msra.mxu0 %v1573
            %1597 = vmatprep.subr.bf16.mxu0 0
            %1598 = vmatpush1.bf16.msra.mxu0 %v1574
            %1599 = vmatprep.subr.bf16.mxu0 0
            %1600 = vmatpush1.bf16.msra.mxu0 %v1575
            %1601 = vmatprep.subr.bf16.mxu0 0
            %1602 = vmatpush1.bf16.msra.mxu0 %v1576
            %1603 = vmatprep.subr.bf16.mxu0 0
            %1604 = vmatpush1.bf16.msra.mxu0 %v1577
            %1605 = vmatprep.subr.bf16.mxu0 0
            %1606 = vmatpush1.bf16.msra.mxu0 %v1578
            %1607 = vmatprep.subr.bf16.mxu0 0
            %1608 = vmatpush1.bf16.msra.mxu0 %v1579
            %1609 = vmatprep.subr.bf16.mxu0 0
            %1610 = vmatpush1.bf16.msra.mxu0 0
            %1611 = vmatprep.subr.bf16.mxu0 0
            %1612 = vmatpush1.bf16.msra.mxu0 0
            %1613 = vmatprep.subr.bf16.mxu0 0
            %1614 = vmatpush1.bf16.msra.mxu0 0
            %1615 = vmatprep.subr.bf16.mxu0 0
            %1616 = vmatpush1.bf16.msra.mxu0 0
            %1617 = vmatprep.subr.bf16.mxu0 0
            %1618 = vmatpush1.bf16.msra.mxu0 0
            %1619 = vmatprep.subr.bf16.mxu0 0
            %1620 = vmatpush1.bf16.msra.mxu0 0
            %1621 = vmatprep.subr.bf16.mxu0 0
            %1622 = vmatpush1.bf16.msra.mxu0 0
            %1623 = vmatprep.subr.bf16.mxu0 0
            %1624 = vmatpush1.bf16.msra.mxu0 0
            %1625 = vmatprep.mubr.bf16.mxu0 0
            %1626 = vmatmul.mubr.bf16.gmra.mrb[0].mxu0 %v1592
            %v1627 = vpop.f32.mrb[0].mxu0
            %v1628 = vadd.f32 0.0, %v1627
            %v1629 = vpop.f32.mrb[0].mxu0
            %v1630 = vpop.f32.mrb[0].mxu0
            %v1631 = vpop.f32.mrb[0].mxu0
            %1632 = vdwg.mxu0
            %v1633 = vpack.c.bf16 %v1628, %v1628
            %v1634 = vld [vmem:[#allocation16] sm:$0xf]
            %v1635 = vld [vmem:[#allocation16 + $0x4] sm:$0xf]
            %v1636 = vld [vmem:[#allocation16 + $0x8] sm:$0xf]
            %v1637 = vld [vmem:[#allocation16 + $0xc] sm:$0xf]
            %v1638 = vld [vmem:[#allocation16 + $0x10] sm:$0xf]
            %v1639 = vld [vmem:[#allocation16 + $0x14] sm:$0xf]
            %v1640 = vld [vmem:[#allocation16 + $0x18] sm:$0xf]
            %v1641 = vld [vmem:[#allocation16 + $0x1c] sm:$0xf]
            %v1642 = vld [vmem:[#allocation16 + $0x20] sm:$0xf]
            %v1643 = vld [vmem:[#allocation16 + $0x24] sm:$0xf]
            %v1644 = vld [vmem:[#allocation16 + $0x28] sm:$0xf]
            %v1645 = vld [vmem:[#allocation16 + $0x2c] sm:$0xf]
            %v1646 = vld [vmem:[#allocation16 + $0x30] sm:$0xf]
            %v1647 = vld [vmem:[#allocation16 + $0x34] sm:$0xf]
            %v1648 = vld [vmem:[#allocation16 + $0x38] sm:$0xf]
            %v1649 = vld [vmem:[#allocation16 + $0x3c] sm:$0xf]
            %v1650 = vld [vmem:[%s7] sm:$0x1]
            %v1652 = vlaneseq
            %v1653 = vshrl.u32 %v1652, 7
            %v1654 = vsub.s32 0, %v1653
            %v1655 = vrot.slane %v1650, %v1654
            %v1673 = vunpack.c.l.b16 %v1634
            %v1674 = vunpack.c.l.b16 %v1635
            %v1675 = vunpack.c.l.b16 %v1636
            %v1676 = vunpack.c.l.b16 %v1637
            %v1677 = vunpack.c.l.b16 %v1638
            %v1678 = vunpack.c.l.b16 %v1639
            %v1679 = vunpack.c.l.b16 %v1640
            %v1680 = vunpack.c.l.b16 %v1641
            %v1681 = vunpack.c.l.b16 %v1642
            %v1682 = vunpack.c.l.b16 %v1643
            %v1683 = vunpack.c.l.b16 %v1644
            %v1684 = vunpack.c.l.b16 %v1645
            %v1685 = vunpack.c.l.b16 %v1646
            %v1686 = vunpack.c.l.b16 %v1647
            %v1687 = vunpack.c.l.b16 %v1648
            %v1688 = vunpack.c.l.b16 %v1649
            %v1689 = vpack.c.b16 %v1674, %v1673
            %v1690 = vpack.c.b16 %v1676, %v1675
            %v1691 = vpack.c.b16 %v1678, %v1677
            %v1692 = vpack.c.b16 %v1680, %v1679
            %v1693 = vpack.c.b16 %v1682, %v1681
            %v1694 = vpack.c.b16 %v1684, %v1683
            %v1695 = vpack.c.b16 %v1686, %v1685
            %v1696 = vpack.c.b16 %v1688, %v1687
            %1705 = vmatprep.subr.bf16.mxu0 0
            %1706 = vmatpush1.bf16.msra.mxu0 %v1689
            %1707 = vmatprep.subr.bf16.mxu0 0
            %1708 = vmatpush1.bf16.msra.mxu0 %v1690
            %1709 = vmatprep.subr.bf16.mxu0 0
            %1710 = vmatpush1.bf16.msra.mxu0 %v1691
            %1711 = vmatprep.subr.bf16.mxu0 0
            %1712 = vmatpush1.bf16.msra.mxu0 %v1692
            %1713 = vmatprep.subr.bf16.mxu0 0
            %1714 = vmatpush1.bf16.msra.mxu0 %v1693
            %1715 = vmatprep.subr.bf16.mxu0 0
            %1716 = vmatpush1.bf16.msra.mxu0 %v1694
            %1717 = vmatprep.subr.bf16.mxu0 0
            %1718 = vmatpush1.bf16.msra.mxu0 %v1695
            %1719 = vmatprep.subr.bf16.mxu0 0
            %1720 = vmatpush1.bf16.msra.mxu0 %v1696
            %1721 = vmatprep.subr.bf16.mxu0 0
            %1722 = vmatpush1.bf16.msra.mxu0 0
            %1723 = vmatprep.subr.bf16.mxu0 0
            %1724 = vmatpush1.bf16.msra.mxu0 0
            %1725 = vmatprep.subr.bf16.mxu0 0
            %1726 = vmatpush1.bf16.msra.mxu0 0
            %1727 = vmatprep.subr.bf16.mxu0 0
            %1728 = vmatpush1.bf16.msra.mxu0 0
            %1729 = vmatprep.subr.bf16.mxu0 0
            %1730 = vmatpush1.bf16.msra.mxu0 0
            %1731 = vmatprep.subr.bf16.mxu0 0
            %1732 = vmatpush1.bf16.msra.mxu0 0
            %1733 = vmatprep.subr.bf16.mxu0 0
            %1734 = vmatpush1.bf16.msra.mxu0 0
            %1735 = vmatprep.subr.bf16.mxu0 0
            %1736 = vmatpush1.bf16.msra.mxu0 0
            %1737 = vmatprep.mubr.bf16.mxu0 0
            %1738 = vmatmul.mubr.bf16.gmra.mrb[0].mxu0 %v1633
            %v1739 = vpop.f32.mrb[0].mxu0
            %v1740 = vadd.f32 %v1655, %v1739
            %v1741 = vpop.f32.mrb[0].mxu0
            %v1742 = vpop.f32.mrb[0].mxu0
            %v1743 = vpop.f32.mrb[0].mxu0
            %1744 = vdwg.mxu0
            %1745 = vst [vmem:[#allocation18] sm:$0xff] %v1740
          $region100: #{tpu_custom_call.1} parent=91 // pred_fallthru
            _
        $region92: #{tpu_custom_call.1} parent=51 // pred_fallthru
          _
        // Predicated region
        $region101: #{tpu_custom_call.1} parent=51 // pred_check
          %p1746 = pneg %p243
        $region102: #{tpu_custom_call.1} parent=51 // pred_check_branch
          %1748 = sbr.rel (%p1746) target = $region104
        $region103: #{tpu_custom_call.1} parent=51 // pred_region
          %s1750 = ssub.s32 128, 128
          %1751 = vsyncadd [#allocation9], %s1750
          %s1753 = sshll.u32 [#allocation18], 4
          %s1754 = int_to_ptr.vmem [resolvable:$true] %s1753
          %1756 = dma.vmem_to_hbm [thread:$0]  %s1754, 128, %s8, [#allocation9]
        $region104: #{tpu_custom_call.1} parent=51 // pred_fallthru
          _
        // Predicated region
        $region105: #{tpu_custom_call.1} parent=51 // pred_check
          %p1757 = pneg %p243
        $region106: #{tpu_custom_call.1} parent=51 // pred_check_branch
          %1759 = sbr.rel (%p1757) target = $region108
        $region107: #{tpu_custom_call.1} parent=51 // pred_region
          %1760 = dma.done [#allocation9], 128
        $region108: #{tpu_custom_call.1} parent=51 // pred_fallthru
          _
      $region52: #{tpu_custom_call.1} parent=5 // pred_fallthru
        _
      %p1761 = scmp.le.s32.totalorder 2, %s21
      // Predicated region
      $region109: #{tpu_custom_call.1} parent=5 // pred_check
        %p1762 = pneg %p1761
      $region110: #{tpu_custom_call.1} parent=5 // pred_check_branch
        %1764 = sbr.rel (%p1762) target = $region112
      $region111: #{tpu_custom_call.1} parent=5 // pred_region
        %s1765 = ssub.s32 %s21, 2
      $region112: #{tpu_custom_call.1} parent=5 // pred_fallthru
        _
    $region6: #{tpu_custom_call.1} parent=1 // loop_footer
      %s25 = sadd.s32 1, %s21
    $region7: #{tpu_custom_call.1} parent=1 // loop_footer_branch
      %20 = sbr.rel target = $region3
    $region8: #{tpu_custom_call.1} parent=1 // loop_exit
      _
    %1766 = vsyncpa [#allocation8], 1
    %s1767 = scalar_lea.sflag [#allocation8], 1
    %1768 = vsyncpa %s1767, 1
    %1769 = vsyncpa [#allocation11], 1
    %1770 = vsyncpa [#allocation14], 1
    %s1771 = scalar_lea.sflag [#allocation14], 1
    %1772 = vsyncpa %s1771, 1
    %1773 = vsyncpa [#allocation17], 1
    %1774 = vsyncpa [#allocation9], 1
    %s1775 = scalar_lea.sflag [#allocation9], 1
    %1776 = vsyncpa %s1775, 1

</llo_original>
